<compile_context>
chip_gen: v5e
topology: v5e:2x2
jax: 0.10.0
libtpu: 0.0.40
codegen_flags: <defaults>
</compile_context>

<pallas_src>
from functools import partial

import jax
import jax.numpy as jnp
from jax.experimental import pallas as pl
from jax.experimental.pallas import tpu as pltpu  # noqa: F401  (TPU backend)


# ------------------------------ fused kernel ------------------------------- #

def _fused_forward_kernel(x_ref, a_ref, lw_ref, lb_ref, w0_ref,
                          wrz_ref, brz_ref, win_ref, bin_ref, whn_ref, bhn_ref,
                          o_ref):
    """Entire MultiLayerEGCNO forward on VMEM-resident, lane-padded (128-wide) tensors.

    Shapes (padded; U = num_units):
      x_ref   : (Np, Fp)        node features
      a_ref   : (Np, Np)        pre-normalized adjacency  D^-1/2 A D^-1/2
      lw_ref  : (Fp, Cp)        Linear weight (pre-transposed)
      lb_ref  : (1,  Cp)        Linear bias
      w0_ref  : (U,  Cp, Cp)    per-unit initial GCN weight
      wrz_ref : (U*2, Cp, Cp)   per-unit folded (r, z) gate weights  (Wih + Whh)
      brz_ref : (U*2, 1, Cp)    per-unit folded (r, z) gate biases   (bih + bhh)
      win_ref : (U,  Cp, Cp)    per-unit n-gate input weight
      bin_ref : (U,  1, Cp)     per-unit n-gate input bias
      whn_ref : (U,  Cp, Cp)    per-unit n-gate hidden weight
      bhn_ref : (U,  1, Cp)     per-unit n-gate hidden bias
      o_ref   : (Np, Cp)        output node features
    """
    f32 = jnp.float32

    # Input projection: X <- X @ W_lin + b_lin
    x = jnp.dot(x_ref[...], lw_ref[...], preferred_element_type=f32) + lb_ref[...]
    a_norm = a_ref[...]

    num_units = w0_ref.shape[0]
    for u in range(num_units):              # static unroll: GRU matmuls issue back-to-back
        w0 = w0_ref[u]                      # (Cp, Cp)

        # r / z gates: folded ih+hh matmul (one MXU op each).
        r = jax.nn.sigmoid(
            jnp.dot(w0, wrz_ref[2 * u + 0], preferred_element_type=f32)
            + brz_ref[2 * u + 0])
        z = jax.nn.sigmoid(
            jnp.dot(w0, wrz_ref[2 * u + 1], preferred_element_type=f32)
            + brz_ref[2 * u + 1])

        # n gate: PyTorch GRU keeps bias_hn inside r * (.)
        gi_n = jnp.dot(w0, win_ref[u], preferred_element_type=f32) + bin_ref[u]
        gh_n = jnp.dot(w0, whn_ref[u], preferred_element_type=f32) + bhn_ref[u]
        n = jnp.tanh(gi_n + r * gh_n)

        w = (1.0 - z) * n + z * w0          # evolved GCN weight for this unit

        # GCN layer with fixed weight: X <- A_norm @ (X @ W)
        x = jnp.dot(a_norm,
                    jnp.dot(x, w, preferred_element_type=f32),
                    preferred_element_type=f32)

    o_ref[...] = x


# --------------------------------- glue ------------------------------------ #

def _round_up(x, m):
    return ((x + m - 1) // m) * m


def _pad_to(x, shape):
    pads = [(0, t - s) for s, t in zip(x.shape, shape)]
    return jnp.pad(x.astype(jnp.float32), pads)


def dense_adjacency(edge_index, num_nodes):
    # TODO(synk): data-dependent edge scatter has no clean whole-array Pallas form at this
    # scale; built once per call as XLA glue (cache A_norm outside if the graph is static).
    src, dst = edge_index[0], edge_index[1]
    a = jnp.zeros((num_nodes, num_nodes), jnp.float32)
    return a.at[dst, src].add(1.0)                     # A[dst, src] += w


@partial(jax.jit, static_argnames=("num_nodes",))
def multilayer_egcno_forward(params, x, edge_index, num_nodes):
    n, f = x.shape
    c = params["lin_w"].shape[1]
    u = params["w0"].shape[0]

    n_p = _round_up(max(n, 8), 8)        # sublane-aligned node axis
    f_p = _round_up(f, 128)              # lane-dense input-feature axis
    c_p = _round_up(c, 128)              # lane-dense channel axis

    # Symmetric normalization hoisted out of the per-layer loop (A never changes).
    a = dense_adjacency(edge_index, num_nodes)
    deg = jnp.sum(a, axis=1, keepdims=True)
    dinv = jnp.where(deg > 0.0, jax.lax.rsqrt(deg), 0.0)
    a_norm = dinv * a * dinv.T                          # D^-1/2 A D^-1/2

    # Fold the r/z gate ih + hh weights/biases (valid: both matmuls share the same
    # LHS W0, so gi + gh == W0 @ (Wih + Whh) + (bih + bhh)). O(C^2) wrapper work that
    # removes 2 of the 6 GRU matmuls per unit inside the kernel.
    wrz = params["wih"][:, :2] + params["whh"][:, :2]             # (U, 2, C, C)
    brz = params["bih"][:, :2] + params["bhh"][:, :2]             # (U, 2, C)
    win, whn = params["wih"][:, 2], params["whh"][:, 2]           # (U, C, C)
    bin_, bhn = params["bih"][:, 2], params["bhh"][:, 2]          # (U, C)

    # Zero-pad everything to lane-dense shapes (padding is mathematically inert:
    # padded W columns stay exactly zero through the GRU, padded X rows/cols never
    # reach real outputs because A_norm's padded rows/cols are zero).
    x_p = _pad_to(x, (n_p, f_p))
    a_p = _pad_to(a_norm, (n_p, n_p))
    lw_p = _pad_to(params["lin_w"], (f_p, c_p))
    lb_p = _pad_to(params["lin_b"].reshape(1, c), (1, c_p))
    w0_p = _pad_to(params["w0"], (u, c_p, c_p))
    wrz_p = _pad_to(wrz, (u, 2, c_p, c_p)).reshape(u * 2, c_p, c_p)
    brz_p = _pad_to(brz.reshape(u, 2, 1, c), (u, 2, 1, c_p)).reshape(u * 2, 1, c_p)
    win_p = _pad_to(win, (u, c_p, c_p))
    whn_p = _pad_to(whn, (u, c_p, c_p))
    bin_p = _pad_to(bin_.reshape(u, 1, c), (u, 1, c_p))
    bhn_p = _pad_to(bhn.reshape(u, 1, c), (u, 1, c_p))

    out_p = pl.pallas_call(
        _fused_forward_kernel,
        out_shape=jax.ShapeDtypeStruct((n_p, c_p), jnp.float32),
        # No grid / no BlockSpecs: every (tiny, ~1 MiB total) operand is loaded whole
        # into VMEM and stays resident for the entire fused forward.
    )(x_p, a_p, lw_p, lb_p, w0_p, wrz_p, brz_p, win_p, bin_p, whn_p, bhn_p)

    return out_p[:n, :c]


# ------------------------- parameters & reference --------------------------- #

def init_params(key, num_units, in_channels, inp_dim):
    c = in_channels
    k = jax.random.split(key, 7)
    stdv_lin = 1.0 / float(inp_dim) ** 0.5
    stdv = 1.0 / float(c) ** 0.5
    return {
        # nn.Linear(inp_dim, in_channels): stored pre-transposed (inp_dim, C)
        "lin_w": jax.random.uniform(k[0], (inp_dim, c), jnp.float32, -stdv_lin, stdv_lin),
        "lin_b": jax.random.uniform(k[1], (c,), jnp.float32, -stdv_lin, stdv_lin),
        # per-unit EvolveGCN-O params; GRU gate axis ordered (r, z, n) as in torch.nn.GRU
        "w0":  jax.random.uniform(k[2], (num_units, c, c), jnp.float32, -stdv, stdv),
        "wih": jax.random.uniform(k[3], (num_units, 3, c, c), jnp.float32, -stdv, stdv),
        "whh": jax.random.uniform(k[4], (num_units, 3, c, c), jnp.float32, -stdv, stdv),
        "bih": jax.random.uniform(k[5], (num_units, 3, c), jnp.float32, -stdv, stdv),
        "bhh": jax.random.uniform(k[6], (num_units, 3, c), jnp.float32, -stdv, stdv),
    }


def reference_forward(params, x, edge_index, num_nodes):
    # Pure-JAX reference (full-precision matmuls, un-folded GRU gates) with the
    # original per-gate math of torch.nn.GRU + GCNConv_Fixed_W.
    hp = jax.lax.Precision.HIGHEST
    dot = lambda a, b: jnp.dot(a, b, precision=hp)

    a = dense_adjacency(edge_index, num_nodes)
    deg = jnp.sum(a, axis=1, keepdims=True)
    dinv = jnp.where(deg > 0.0, 1.0 / jnp.sqrt(deg), 0.0)
    a_norm = dinv * a * dinv.T

    h = dot(x, params["lin_w"]) + params["lin_b"]
    for u in range(params["w0"].shape[0]):
        w0 = params["w0"][u]
        gi = lambda g: dot(w0, params["wih"][u, g]) + params["bih"][u, g]
        gh = lambda g: dot(w0, params["whh"][u, g]) + params["bhh"][u, g]
        r = jax.nn.sigmoid(gi(0) + gh(0))
        z = jax.nn.sigmoid(gi(1) + gh(1))
        n = jnp.tanh(gi(2) + r * gh(2))
        w = (1.0 - z) * n + z * w0
        h = dot(a_norm, dot(h, w))
    return h


# ---------------------------------- main ------------------------------------ #

if __name__ == "__main__":
    num_nodes = 64
    inp_dim = 16
    in_channels = 32
    num_units = 2
    num_edges = 192

    root = jax.random.PRNGKey(0)
    k_x, k_e, k_p = jax.random.split(root, 3)

    x = jax.random.normal(k_x, (num_nodes, inp_dim), jnp.float32)
    edge_index = jax.random.randint(k_e, (2, num_edges), 0, num_nodes, jnp.int32)
    params = init_params(k_p, num_units, in_channels, inp_dim)

    out = multilayer_egcno_forward(params, x, edge_index, num_nodes)
    out = jax.block_until_ready(out)

    ref = jax.block_until_ready(reference_forward(params, x, edge_index, num_nodes))
    assert out.shape == (num_nodes, in_channels)
    assert jnp.allclose(out, ref, atol=1e-3, rtol=1e-3), (
        "Pallas output mismatch vs reference; max abs diff = "
        f"{float(jnp.max(jnp.abs(out - ref)))}")

    print("KERNEL_OK")
</pallas_src>

<mosaic_0001>
module attributes {stable_mosaic.version = 11 : i64} {
  func.func @_fused_forward_kernel(%arg0: memref<64x128xf32, #tpu.memory_space<vmem>>, %arg1: memref<64x64xf32, #tpu.memory_space<vmem>>, %arg2: memref<128x128xf32, #tpu.memory_space<vmem>>, %arg3: memref<1x128xf32, #tpu.memory_space<vmem>>, %arg4: memref<2x128x128xf32, #tpu.memory_space<vmem>>, %arg5: memref<4x128x128xf32, #tpu.memory_space<vmem>>, %arg6: memref<4x1x128xf32, #tpu.memory_space<vmem>>, %arg7: memref<2x128x128xf32, #tpu.memory_space<vmem>>, %arg8: memref<2x1x128xf32, #tpu.memory_space<vmem>>, %arg9: memref<2x128x128xf32, #tpu.memory_space<vmem>>, %arg10: memref<2x1x128xf32, #tpu.memory_space<vmem>>, %arg11: memref<64x128xf32, #tpu.memory_space<vmem>>) attributes {dimension_semantics = [], scalar_prefetch = 0 : i64, scratch_operands = 0 : i64, tpu.core_type = #tpu.core_type<tc>} {
    %c0 = arith.constant 0 : index
    %c0_0 = arith.constant 0 : index
    %0 = vector.load %arg0[%c0, %c0_0] : memref<64x128xf32, #tpu.memory_space<vmem>>, vector<64x128xf32>
    %c0_1 = arith.constant 0 : index
    %c0_2 = arith.constant 0 : index
    %1 = vector.load %arg2[%c0_1, %c0_2] : memref<128x128xf32, #tpu.memory_space<vmem>>, vector<128x128xf32>
    %cst = arith.constant dense<0.000000e+00> : vector<64x128xf32>
    %2 = tpu.matmul %0, %1, %cst {dimension_numbers = #tpu.dot_dimension_numbers<[1], [0], [0], [1], [0, 0, 1, 1], [], []>} : vector<64x128xf32>, vector<128x128xf32>, vector<64x128xf32> -> vector<64x128xf32>
    %c0_3 = arith.constant 0 : index
    %c0_4 = arith.constant 0 : index
    %3 = vector.load %arg3[%c0_3, %c0_4] : memref<1x128xf32, #tpu.memory_space<vmem>>, vector<1x128xf32>
    %4 = vector.broadcast %3 : vector<1x128xf32> to vector<64x128xf32>
    %5 = arith.addf %2, %4 : vector<64x128xf32>
    %c0_5 = arith.constant 0 : index
    %c0_6 = arith.constant 0 : index
    %6 = vector.load %arg1[%c0_5, %c0_6] : memref<64x64xf32, #tpu.memory_space<vmem>>, vector<64x64xf32>
    %c0_7 = arith.constant 0 : index
    %c0_8 = arith.constant 0 : index
    %c0_9 = arith.constant 0 : index
    %7 = vector.load %arg4[%c0_7, %c0_8, %c0_9] : memref<2x128x128xf32, #tpu.memory_space<vmem>>, vector<1x128x128xf32>
    %8 = vector.shape_cast %7 : vector<1x128x128xf32> to vector<128x128xf32>
    %c0_10 = arith.constant 0 : index
    %c0_11 = arith.constant 0 : index
    %c0_12 = arith.constant 0 : index
    %9 = vector.load %arg5[%c0_10, %c0_11, %c0_12] : memref<4x128x128xf32, #tpu.memory_space<vmem>>, vector<1x128x128xf32>
    %10 = vector.shape_cast %9 : vector<1x128x128xf32> to vector<128x128xf32>
    %cst_13 = arith.constant dense<0.000000e+00> : vector<128x128xf32>
    %11 = tpu.matmul %8, %10, %cst_13 {dimension_numbers = #tpu.dot_dimension_numbers<[1], [0], [0], [1], [0, 0, 1, 1], [], []>} : vector<128x128xf32>, vector<128x128xf32>, vector<128x128xf32> -> vector<128x128xf32>
    %c0_14 = arith.constant 0 : index
    %c0_15 = arith.constant 0 : index
    %c0_16 = arith.constant 0 : index
    %12 = vector.load %arg6[%c0_14, %c0_15, %c0_16] : memref<4x1x128xf32, #tpu.memory_space<vmem>>, vector<1x1x128xf32>
    %13 = vector.shape_cast %12 : vector<1x1x128xf32> to vector<1x128xf32>
    %14 = vector.broadcast %13 : vector<1x128xf32> to vector<128x128xf32>
    %15 = arith.addf %11, %14 : vector<128x128xf32>
    %16 = arith.negf %15 : vector<128x128xf32>
    %17 = math.exp %16 : vector<128x128xf32>
    %cst_17 = arith.constant 1.000000e+00 : f32
    %18 = vector.broadcast %cst_17 : f32 to vector<128x128xf32>
    %19 = arith.addf %18, %17 : vector<128x128xf32>
    %20 = arith.divf %18, %19 : vector<128x128xf32>
    %c1 = arith.constant 1 : index
    %c0_18 = arith.constant 0 : index
    %c0_19 = arith.constant 0 : index
    %21 = vector.load %arg5[%c1, %c0_18, %c0_19] : memref<4x128x128xf32, #tpu.memory_space<vmem>>, vector<1x128x128xf32>
    %22 = vector.shape_cast %21 : vector<1x128x128xf32> to vector<128x128xf32>
    %cst_20 = arith.constant dense<0.000000e+00> : vector<128x128xf32>
    %23 = tpu.matmul %8, %22, %cst_20 {dimension_numbers = #tpu.dot_dimension_numbers<[1], [0], [0], [1], [0, 0, 1, 1], [], []>} : vector<128x128xf32>, vector<128x128xf32>, vector<128x128xf32> -> vector<128x128xf32>
    %c1_21 = arith.constant 1 : index
    %c0_22 = arith.constant 0 : index
    %c0_23 = arith.constant 0 : index
    %24 = vector.load %arg6[%c1_21, %c0_22, %c0_23] : memref<4x1x128xf32, #tpu.memory_space<vmem>>, vector<1x1x128xf32>
    %25 = vector.shape_cast %24 : vector<1x1x128xf32> to vector<1x128xf32>
    %26 = vector.broadcast %25 : vector<1x128xf32> to vector<128x128xf32>
    %27 = arith.addf %23, %26 : vector<128x128xf32>
    %28 = arith.negf %27 : vector<128x128xf32>
    %29 = math.exp %28 : vector<128x128xf32>
    %cst_24 = arith.constant 1.000000e+00 : f32
    %30 = vector.broadcast %cst_24 : f32 to vector<128x128xf32>
    %31 = arith.addf %30, %29 : vector<128x128xf32>
    %32 = arith.divf %30, %31 : vector<128x128xf32>
    %c0_25 = arith.constant 0 : index
    %c0_26 = arith.constant 0 : index
    %c0_27 = arith.constant 0 : index
    %33 = vector.load %arg7[%c0_25, %c0_26, %c0_27] : memref<2x128x128xf32, #tpu.memory_space<vmem>>, vector<1x128x128xf32>
    %34 = vector.shape_cast %33 : vector<1x128x128xf32> to vector<128x128xf32>
    %cst_28 = arith.constant dense<0.000000e+00> : vector<128x128xf32>
    %35 = tpu.matmul %8, %34, %cst_28 {dimension_numbers = #tpu.dot_dimension_numbers<[1], [0], [0], [1], [0, 0, 1, 1], [], []>} : vector<128x128xf32>, vector<128x128xf32>, vector<128x128xf32> -> vector<128x128xf32>
    %c0_29 = arith.constant 0 : index
    %c0_30 = arith.constant 0 : index
    %c0_31 = arith.constant 0 : index
    %36 = vector.load %arg8[%c0_29, %c0_30, %c0_31] : memref<2x1x128xf32, #tpu.memory_space<vmem>>, vector<1x1x128xf32>
    %37 = vector.shape_cast %36 : vector<1x1x128xf32> to vector<1x128xf32>
    %38 = vector.broadcast %37 : vector<1x128xf32> to vector<128x128xf32>
    %39 = arith.addf %35, %38 : vector<128x128xf32>
    %c0_32 = arith.constant 0 : index
    %c0_33 = arith.constant 0 : index
    %c0_34 = arith.constant 0 : index
    %40 = vector.load %arg9[%c0_32, %c0_33, %c0_34] : memref<2x128x128xf32, #tpu.memory_space<vmem>>, vector<1x128x128xf32>
    %41 = vector.shape_cast %40 : vector<1x128x128xf32> to vector<128x128xf32>
    %cst_35 = arith.constant dense<0.000000e+00> : vector<128x128xf32>
    %42 = tpu.matmul %8, %41, %cst_35 {dimension_numbers = #tpu.dot_dimension_numbers<[1], [0], [0], [1], [0, 0, 1, 1], [], []>} : vector<128x128xf32>, vector<128x128xf32>, vector<128x128xf32> -> vector<128x128xf32>
    %c0_36 = arith.constant 0 : index
    %c0_37 = arith.constant 0 : index
    %c0_38 = arith.constant 0 : index
    %43 = vector.load %arg10[%c0_36, %c0_37, %c0_38] : memref<2x1x128xf32, #tpu.memory_space<vmem>>, vector<1x1x128xf32>
    %44 = vector.shape_cast %43 : vector<1x1x128xf32> to vector<1x128xf32>
    %45 = vector.broadcast %44 : vector<1x128xf32> to vector<128x128xf32>
    %46 = arith.addf %42, %45 : vector<128x128xf32>
    %47 = arith.mulf %20, %46 : vector<128x128xf32>
    %48 = arith.addf %39, %47 : vector<128x128xf32>
    %49 = math.tanh %48 : vector<128x128xf32>
    %cst_39 = arith.constant 1.000000e+00 : f32
    %50 = vector.broadcast %cst_39 : f32 to vector<128x128xf32>
    %51 = arith.subf %50, %32 : vector<128x128xf32>
    %52 = arith.mulf %51, %49 : vector<128x128xf32>
    %53 = arith.mulf %32, %8 : vector<128x128xf32>
    %54 = arith.addf %52, %53 : vector<128x128xf32>
    %cst_40 = arith.constant dense<0.000000e+00> : vector<64x128xf32>
    %55 = tpu.matmul %5, %54, %cst_40 {dimension_numbers = #tpu.dot_dimension_numbers<[1], [0], [0], [1], [0, 0, 1, 1], [], []>} : vector<64x128xf32>, vector<128x128xf32>, vector<64x128xf32> -> vector<64x128xf32>
    %cst_41 = arith.constant dense<0.000000e+00> : vector<64x128xf32>
    %56 = tpu.matmul %6, %55, %cst_41 {dimension_numbers = #tpu.dot_dimension_numbers<[1], [0], [0], [1], [0, 0, 1, 1], [], []>} : vector<64x64xf32>, vector<64x128xf32>, vector<64x128xf32> -> vector<64x128xf32>
    %c1_42 = arith.constant 1 : index
    %c0_43 = arith.constant 0 : index
    %c0_44 = arith.constant 0 : index
    %57 = vector.load %arg4[%c1_42, %c0_43, %c0_44] : memref<2x128x128xf32, #tpu.memory_space<vmem>>, vector<1x128x128xf32>
    %58 = vector.shape_cast %57 : vector<1x128x128xf32> to vector<128x128xf32>
    %c2 = arith.constant 2 : index
    %c0_45 = arith.constant 0 : index
    %c0_46 = arith.constant 0 : index
    %59 = vector.load %arg5[%c2, %c0_45, %c0_46] : memref<4x128x128xf32, #tpu.memory_space<vmem>>, vector<1x128x128xf32>
    %60 = vector.shape_cast %59 : vector<1x128x128xf32> to vector<128x128xf32>
    %cst_47 = arith.constant dense<0.000000e+00> : vector<128x128xf32>
    %61 = tpu.matmul %58, %60, %cst_47 {dimension_numbers = #tpu.dot_dimension_numbers<[1], [0], [0], [1], [0, 0, 1, 1], [], []>} : vector<128x128xf32>, vector<128x128xf32>, vector<128x128xf32> -> vector<128x128xf32>
    %c2_48 = arith.constant 2 : index
    %c0_49 = arith.constant 0 : index
    %c0_50 = arith.constant 0 : index
    %62 = vector.load %arg6[%c2_48, %c0_49, %c0_50] : memref<4x1x128xf32, #tpu.memory_space<vmem>>, vector<1x1x128xf32>
    %63 = vector.shape_cast %62 : vector<1x1x128xf32> to vector<1x128xf32>
    %64 = vector.broadcast %63 : vector<1x128xf32> to vector<128x128xf32>
    %65 = arith.addf %61, %64 : vector<128x128xf32>
    %66 = arith.negf %65 : vector<128x128xf32>
    %67 = math.exp %66 : vector<128x128xf32>
    %cst_51 = arith.constant 1.000000e+00 : f32
    %68 = vector.broadcast %cst_51 : f32 to vector<128x128xf32>
    %69 = arith.addf %68, %67 : vector<128x128xf32>
    %70 = arith.divf %68, %69 : vector<128x128xf32>
    %c3 = arith.constant 3 : index
    %c0_52 = arith.constant 0 : index
    %c0_53 = arith.constant 0 : index
    %71 = vector.load %arg5[%c3, %c0_52, %c0_53] : memref<4x128x128xf32, #tpu.memory_space<vmem>>, vector<1x128x128xf32>
    %72 = vector.shape_cast %71 : vector<1x128x128xf32> to vector<128x128xf32>
    %cst_54 = arith.constant dense<0.000000e+00> : vector<128x128xf32>
    %73 = tpu.matmul %58, %72, %cst_54 {dimension_numbers = #tpu.dot_dimension_numbers<[1], [0], [0], [1], [0, 0, 1, 1], [], []>} : vector<128x128xf32>, vector<128x128xf32>, vector<128x128xf32> -> vector<128x128xf32>
    %c3_55 = arith.constant 3 : index
    %c0_56 = arith.constant 0 : index
    %c0_57 = arith.constant 0 : index
    %74 = vector.load %arg6[%c3_55, %c0_56, %c0_57] : memref<4x1x128xf32, #tpu.memory_space<vmem>>, vector<1x1x128xf32>
    %75 = vector.shape_cast %74 : vector<1x1x128xf32> to vector<1x128xf32>
    %76 = vector.broadcast %75 : vector<1x128xf32> to vector<128x128xf32>
    %77 = arith.addf %73, %76 : vector<128x128xf32>
    %78 = arith.negf %77 : vector<128x128xf32>
    %79 = math.exp %78 : vector<128x128xf32>
    %cst_58 = arith.constant 1.000000e+00 : f32
    %80 = vector.broadcast %cst_58 : f32 to vector<128x128xf32>
    %81 = arith.addf %80, %79 : vector<128x128xf32>
    %82 = arith.divf %80, %81 : vector<128x128xf32>
    %c1_59 = arith.constant 1 : index
    %c0_60 = arith.constant 0 : index
    %c0_61 = arith.constant 0 : index
    %83 = vector.load %arg7[%c1_59, %c0_60, %c0_61] : memref<2x128x128xf32, #tpu.memory_space<vmem>>, vector<1x128x128xf32>
    %84 = vector.shape_cast %83 : vector<1x128x128xf32> to vector<128x128xf32>
    %cst_62 = arith.constant dense<0.000000e+00> : vector<128x128xf32>
    %85 = tpu.matmul %58, %84, %cst_62 {dimension_numbers = #tpu.dot_dimension_numbers<[1], [0], [0], [1], [0, 0, 1, 1], [], []>} : vector<128x128xf32>, vector<128x128xf32>, vector<128x128xf32> -> vector<128x128xf32>
    %c1_63 = arith.constant 1 : index
    %c0_64 = arith.constant 0 : index
    %c0_65 = arith.constant 0 : index
    %86 = vector.load %arg8[%c1_63, %c0_64, %c0_65] : memref<2x1x128xf32, #tpu.memory_space<vmem>>, vector<1x1x128xf32>
    %87 = vector.shape_cast %86 : vector<1x1x128xf32> to vector<1x128xf32>
    %88 = vector.broadcast %87 : vector<1x128xf32> to vector<128x128xf32>
    %89 = arith.addf %85, %88 : vector<128x128xf32>
    %c1_66 = arith.constant 1 : index
    %c0_67 = arith.constant 0 : index
    %c0_68 = arith.constant 0 : index
    %90 = vector.load %arg9[%c1_66, %c0_67, %c0_68] : memref<2x128x128xf32, #tpu.memory_space<vmem>>, vector<1x128x128xf32>
    %91 = vector.shape_cast %90 : vector<1x128x128xf32> to vector<128x128xf32>
    %cst_69 = arith.constant dense<0.000000e+00> : vector<128x128xf32>
    %92 = tpu.matmul %58, %91, %cst_69 {dimension_numbers = #tpu.dot_dimension_numbers<[1], [0], [0], [1], [0, 0, 1, 1], [], []>} : vector<128x128xf32>, vector<128x128xf32>, vector<128x128xf32> -> vector<128x128xf32>
    %c1_70 = arith.constant 1 : index
    %c0_71 = arith.constant 0 : index
    %c0_72 = arith.constant 0 : index
    %93 = vector.load %arg10[%c1_70, %c0_71, %c0_72] : memref<2x1x128xf32, #tpu.memory_space<vmem>>, vector<1x1x128xf32>
    %94 = vector.shape_cast %93 : vector<1x1x128xf32> to vector<1x128xf32>
    %95 = vector.broadcast %94 : vector<1x128xf32> to vector<128x128xf32>
    %96 = arith.addf %92, %95 : vector<128x128xf32>
    %97 = arith.mulf %70, %96 : vector<128x128xf32>
    %98 = arith.addf %89, %97 : vector<128x128xf32>
    %99 = math.tanh %98 : vector<128x128xf32>
    %cst_73 = arith.constant 1.000000e+00 : f32
    %100 = vector.broadcast %cst_73 : f32 to vector<128x128xf32>
    %101 = arith.subf %100, %82 : vector<128x128xf32>
    %102 = arith.mulf %101, %99 : vector<128x128xf32>
    %103 = arith.mulf %82, %58 : vector<128x128xf32>
    %104 = arith.addf %102, %103 : vector<128x128xf32>
    %cst_74 = arith.constant dense<0.000000e+00> : vector<64x128xf32>
    %105 = tpu.matmul %56, %104, %cst_74 {dimension_numbers = #tpu.dot_dimension_numbers<[1], [0], [0], [1], [0, 0, 1, 1], [], []>} : vector<64x128xf32>, vector<128x128xf32>, vector<64x128xf32> -> vector<64x128xf32>
    %cst_75 = arith.constant dense<0.000000e+00> : vector<64x128xf32>
    %106 = tpu.matmul %6, %105, %cst_75 {dimension_numbers = #tpu.dot_dimension_numbers<[1], [0], [0], [1], [0, 0, 1, 1], [], []>} : vector<64x64xf32>, vector<64x128xf32>, vector<64x128xf32> -> vector<64x128xf32>
    %c0_76 = arith.constant 0 : index
    %c0_77 = arith.constant 0 : index
    %107 = vector.load %arg11[%c0_76, %c0_77] : memref<64x128xf32, #tpu.memory_space<vmem>>, vector<64x128xf32>
    tpu.vector_store %arg11[%c0_76, %c0_77], %106 {strides = array<i32>} : memref<64x128xf32, #tpu.memory_space<vmem>>, vector<64x128xf32>,
    return
  }
}

</mosaic_0001>

<llo_original>
// kernel: multilayer_egcno_forward.1
$region0: #{multilayer_egcno_forward.1}
  #allocation0 [shape = 'u32[]', space=smem, size = 0x4, offset = 0x4, fixed_abs, tag = 'smem constant byte address 0x4 - core index']
  #allocation1 [shape = 'u32[72,128]{1,0:T(1,128)}', space=vmem, size = 0x9000, scoped, tag = 'internal scratch']
  %s0 = inlined_call_operand.vmem [shape: f32[64,128], index: 0, kind: input, shape index: {}]
  %s1 = inlined_call_operand.vmem [shape: f32[64,64], index: 1, kind: input, shape index: {}]
  %s2 = inlined_call_operand.vmem [shape: f32[128,128], index: 2, kind: input, shape index: {}]
  %s3 = inlined_call_operand.vmem [shape: f32[1,128], index: 3, kind: input, shape index: {}]
  %s4 = inlined_call_operand.vmem [shape: f32[2,128,128], index: 4, kind: input, shape index: {}]
  %s5 = inlined_call_operand.vmem [shape: f32[4,128,128], index: 5, kind: input, shape index: {}]
  %s6 = inlined_call_operand.vmem [shape: f32[4,1,128], index: 6, kind: input, shape index: {}]
  %s7 = inlined_call_operand.vmem [shape: f32[2,128,128], index: 7, kind: input, shape index: {}]
  %s8 = inlined_call_operand.vmem [shape: f32[2,1,128], index: 8, kind: input, shape index: {}]
  %s9 = inlined_call_operand.vmem [shape: f32[2,128,128], index: 9, kind: input, shape index: {}]
  %s10 = inlined_call_operand.vmem [shape: f32[2,1,128], index: 10, kind: input, shape index: {}]
  %s11 = inlined_call_operand.vmem [shape: f32[64,128], index: 11, kind: output, shape index: {}]
  %s12 = sld [smem:[#allocation0]]
  $region54: #{multilayer_egcno_forward.1} parent=0
    _
  %s14 = ssub.s32 1, %s12
  %s15 = scalar_select 0, %s14, %s12
  // Predicated region
  $region2: #{multilayer_egcno_forward.1} parent=0 // pred_check
    _
  $region3: #{multilayer_egcno_forward.1} parent=0 // pred_check_branch
    %17 = sbr.rel (0) target = $region5
  $region4: #{multilayer_egcno_forward.1} parent=0 // pred_region
    _
  $region5: #{multilayer_egcno_forward.1} parent=0 // pred_fallthru
    _
  // Predicated region
  $region6: #{multilayer_egcno_forward.1} parent=0 // pred_check
    _
  $region7: #{multilayer_egcno_forward.1} parent=0 // pred_check_branch
    %19 = sbr.rel (0) target = $region9
  $region8: #{multilayer_egcno_forward.1} parent=0 // pred_region
    _
  $region9: #{multilayer_egcno_forward.1} parent=0 // pred_fallthru
    _
  // Predicated region
  $region10: #{multilayer_egcno_forward.1} parent=0 // pred_check
    _
  $region11: #{multilayer_egcno_forward.1} parent=0 // pred_check_branch
    %21 = sbr.rel (0) target = $region13
  $region12: #{multilayer_egcno_forward.1} parent=0 // pred_region
    _
  $region13: #{multilayer_egcno_forward.1} parent=0 // pred_fallthru
    _
  // Predicated region
  $region14: #{multilayer_egcno_forward.1} parent=0 // pred_check
    _
  $region15: #{multilayer_egcno_forward.1} parent=0 // pred_check_branch
    %23 = sbr.rel (0) target = $region17
  $region16: #{multilayer_egcno_forward.1} parent=0 // pred_region
    _
  $region17: #{multilayer_egcno_forward.1} parent=0 // pred_fallthru
    _
  // Predicated region
  $region18: #{multilayer_egcno_forward.1} parent=0 // pred_check
    _
  $region19: #{multilayer_egcno_forward.1} parent=0 // pred_check_branch
    %25 = sbr.rel (0) target = $region21
  $region20: #{multilayer_egcno_forward.1} parent=0 // pred_region
    _
  $region21: #{multilayer_egcno_forward.1} parent=0 // pred_fallthru
    _
  // Predicated region
  $region22: #{multilayer_egcno_forward.1} parent=0 // pred_check
    _
  $region23: #{multilayer_egcno_forward.1} parent=0 // pred_check_branch
    %27 = sbr.rel (0) target = $region25
  $region24: #{multilayer_egcno_forward.1} parent=0 // pred_region
    _
  $region25: #{multilayer_egcno_forward.1} parent=0 // pred_fallthru
    _
  // Predicated region
  $region26: #{multilayer_egcno_forward.1} parent=0 // pred_check
    _
  $region27: #{multilayer_egcno_forward.1} parent=0 // pred_check_branch
    %29 = sbr.rel (0) target = $region29
  $region28: #{multilayer_egcno_forward.1} parent=0 // pred_region
    _
  $region29: #{multilayer_egcno_forward.1} parent=0 // pred_fallthru
    _
  // Predicated region
  $region30: #{multilayer_egcno_forward.1} parent=0 // pred_check
    _
  $region31: #{multilayer_egcno_forward.1} parent=0 // pred_check_branch
    %31 = sbr.rel (0) target = $region33
  $region32: #{multilayer_egcno_forward.1} parent=0 // pred_region
    _
  $region33: #{multilayer_egcno_forward.1} parent=0 // pred_fallthru
    _
  // Predicated region
  $region34: #{multilayer_egcno_forward.1} parent=0 // pred_check
    _
  $region35: #{multilayer_egcno_forward.1} parent=0 // pred_check_branch
    %33 = sbr.rel (0) target = $region37
  $region36: #{multilayer_egcno_forward.1} parent=0 // pred_region
    _
  $region37: #{multilayer_egcno_forward.1} parent=0 // pred_fallthru
    _
  // Predicated region
  $region38: #{multilayer_egcno_forward.1} parent=0 // pred_check
    _
  $region39: #{multilayer_egcno_forward.1} parent=0 // pred_check_branch
    %35 = sbr.rel (0) target = $region41
  $region40: #{multilayer_egcno_forward.1} parent=0 // pred_region
    _
  $region41: #{multilayer_egcno_forward.1} parent=0 // pred_fallthru
    _
  // Predicated region
  $region42: #{multilayer_egcno_forward.1} parent=0 // pred_check
    _
  $region43: #{multilayer_egcno_forward.1} parent=0 // pred_check_branch
    %37 = sbr.rel (0) target = $region45
  $region44: #{multilayer_egcno_forward.1} parent=0 // pred_region
    _
  $region45: #{multilayer_egcno_forward.1} parent=0 // pred_fallthru
    _
  %v38 = vld [vmem:[%s0] sm:$0xff]
  %v39 = vld [vmem:[%s0 + $0x8] sm:$0xff]
  %v40 = vld [vmem:[%s0 + $0x10] sm:$0xff]
  %v41 = vld [vmem:[%s0 + $0x18] sm:$0xff]
  %v42 = vld [vmem:[%s0 + $0x20] sm:$0xff]
  %v43 = vld [vmem:[%s0 + $0x28] sm:$0xff]
  %v44 = vld [vmem:[%s0 + $0x30] sm:$0xff]
  %v45 = vld [vmem:[%s0 + $0x38] sm:$0xff]
  %v46 = vld [vmem:[%s2] sm:$0xff]
  %v47 = vld [vmem:[%s2 + $0x8] sm:$0xff]
  %v48 = vld [vmem:[%s2 + $0x10] sm:$0xff]
  %v49 = vld [vmem:[%s2 + $0x18] sm:$0xff]
  %v50 = vld [vmem:[%s2 + $0x20] sm:$0xff]
  %v51 = vld [vmem:[%s2 + $0x28] sm:$0xff]
  %v52 = vld [vmem:[%s2 + $0x30] sm:$0xff]
  %v53 = vld [vmem:[%s2 + $0x38] sm:$0xff]
  %v54 = vld [vmem:[%s2 + $0x40] sm:$0xff]
  %v55 = vld [vmem:[%s2 + $0x48] sm:$0xff]
  %v56 = vld [vmem:[%s2 + $0x50] sm:$0xff]
  %v57 = vld [vmem:[%s2 + $0x58] sm:$0xff]
  %v58 = vld [vmem:[%s2 + $0x60] sm:$0xff]
  %v59 = vld [vmem:[%s2 + $0x68] sm:$0xff]
  %v60 = vld [vmem:[%s2 + $0x70] sm:$0xff]
  %v61 = vld [vmem:[%s2 + $0x78] sm:$0xff]
  %v62 = vld [vmem:[%s3] sm:$0x1]
  %v64 = vperm.slane %v62, 0
  %66 = vmatpush.msra.mxu0 %v61
  %67 = vmatpush.msra.mxu0 %v60
  %68 = vmatpush.msra.mxu0 %v59
  %69 = vmatpush.msra.mxu0 %v58
  %70 = vmatpush.msra.mxu0 %v57
  %71 = vmatpush.msra.mxu0 %v56
  %72 = vmatpush.msra.mxu0 %v55
  %73 = vmatpush.msra.mxu0 %v54
  %74 = vmatpush.msra.mxu0 %v53
  %75 = vmatpush.msra.mxu0 %v52
  %76 = vmatpush.msra.mxu0 %v51
  %77 = vmatpush.msra.mxu0 %v50
  %78 = vmatpush.msra.mxu0 %v49
  %79 = vmatpush.msra.mxu0 %v48
  %80 = vmatpush.msra.mxu0 %v47
  %81 = vmatpush.msra.mxu0 %v46
  %82 = vmatmul.f32.gmra.mxu0 %v38
  %v83 = vpop.f32.mrf.mxu0
  %v84 = vadd.f32 %v64, %v83
  %85 = vmatmul.f32.gmra.mxu0 %v39
  %v86 = vpop.f32.mrf.mxu0
  %v87 = vadd.f32 %v64, %v86
  %88 = vmatmul.f32.gmra.mxu0 %v40
  %v89 = vpop.f32.mrf.mxu0
  %v90 = vadd.f32 %v64, %v89
  %91 = vmatmul.f32.gmra.mxu0 %v41
  %v92 = vpop.f32.mrf.mxu0
  %v93 = vadd.f32 %v64, %v92
  %94 = vmatmul.f32.gmra.mxu0 %v42
  %v95 = vpop.f32.mrf.mxu0
  %v96 = vadd.f32 %v64, %v95
  %97 = vmatmul.f32.gmra.mxu0 %v43
  %v98 = vpop.f32.mrf.mxu0
  %v99 = vadd.f32 %v64, %v98
  %100 = vmatmul.f32.gmra.mxu0 %v44
  %v101 = vpop.f32.mrf.mxu0
  %v102 = vadd.f32 %v64, %v101
  %103 = vmatmul.f32.gmra.mxu0 %v45
  %v104 = vpop.f32.mrf.mxu0
  %v105 = vadd.f32 %v64, %v104
  %106 = vdwg.mxu0
  %v107 = vld [vmem:[%s1] sm:$0xff]
  %v108 = vld [vmem:[%s1 + $0x8] sm:$0xff]
  %v109 = vld [vmem:[%s1 + $0x10] sm:$0xff]
  %v110 = vld [vmem:[%s1 + $0x18] sm:$0xff]
  %v111 = vld [vmem:[%s1 + $0x20] sm:$0xff]
  %v112 = vld [vmem:[%s1 + $0x28] sm:$0xff]
  %v113 = vld [vmem:[%s1 + $0x30] sm:$0xff]
  %v114 = vld [vmem:[%s1 + $0x38] sm:$0xff]
  %v115 = vld [vmem:[%s4] sm:$0xff]
  %v116 = vld [vmem:[%s4 + $0x8] sm:$0xff]
  %v117 = vld [vmem:[%s4 + $0x10] sm:$0xff]
  %v118 = vld [vmem:[%s4 + $0x18] sm:$0xff]
  %v119 = vld [vmem:[%s4 + $0x20] sm:$0xff]
  %v120 = vld [vmem:[%s4 + $0x28] sm:$0xff]
  %v121 = vld [vmem:[%s4 + $0x30] sm:$0xff]
  %v122 = vld [vmem:[%s4 + $0x38] sm:$0xff]
  %v123 = vld [vmem:[%s4 + $0x40] sm:$0xff]
  %v124 = vld [vmem:[%s4 + $0x48] sm:$0xff]
  %v125 = vld [vmem:[%s4 + $0x50] sm:$0xff]
  %v126 = vld [vmem:[%s4 + $0x58] sm:$0xff]
  %v127 = vld [vmem:[%s4 + $0x60] sm:$0xff]
  %v128 = vld [vmem:[%s4 + $0x68] sm:$0xff]
  %v129 = vld [vmem:[%s4 + $0x70] sm:$0xff]
  %v130 = vld [vmem:[%s4 + $0x78] sm:$0xff]
  %v131 = vld [vmem:[%s5] sm:$0xff]
  %v132 = vld [vmem:[%s5 + $0x8] sm:$0xff]
  %v133 = vld [vmem:[%s5 + $0x10] sm:$0xff]
  %v134 = vld [vmem:[%s5 + $0x18] sm:$0xff]
  %v135 = vld [vmem:[%s5 + $0x20] sm:$0xff]
  %v136 = vld [vmem:[%s5 + $0x28] sm:$0xff]
  %v137 = vld [vmem:[%s5 + $0x30] sm:$0xff]
  %v138 = vld [vmem:[%s5 + $0x38] sm:$0xff]
  %v139 = vld [vmem:[%s5 + $0x40] sm:$0xff]
  %v140 = vld [vmem:[%s5 + $0x48] sm:$0xff]
  %v141 = vld [vmem:[%s5 + $0x50] sm:$0xff]
  %v142 = vld [vmem:[%s5 + $0x58] sm:$0xff]
  %v143 = vld [vmem:[%s5 + $0x60] sm:$0xff]
  %v144 = vld [vmem:[%s5 + $0x68] sm:$0xff]
  %v145 = vld [vmem:[%s5 + $0x70] sm:$0xff]
  %v146 = vld [vmem:[%s5 + $0x78] sm:$0xff]
  %v147 = vld [vmem:[%s6] sm:$0x1]
  %v149 = vperm.slane %v147, 0
  %151 = vmatpush.msra.mxu0 %v146
  %152 = vmatpush.msra.mxu0 %v145
  %153 = vmatpush.msra.mxu0 %v144
  %154 = vmatpush.msra.mxu0 %v143
  %155 = vmatpush.msra.mxu0 %v142
  %156 = vmatpush.msra.mxu0 %v141
  %157 = vmatpush.msra.mxu0 %v140
  %158 = vmatpush.msra.mxu0 %v139
  %159 = vmatpush.msra.mxu0 %v138
  %160 = vmatpush.msra.mxu0 %v137
  %161 = vmatpush.msra.mxu0 %v136
  %162 = vmatpush.msra.mxu0 %v135
  %163 = vmatpush.msra.mxu0 %v134
  %164 = vmatpush.msra.mxu0 %v133
  %165 = vmatpush.msra.mxu0 %v132
  %166 = vmatpush.msra.mxu0 %v131
  %167 = vmatmul.f32.gmra.mxu0 %v115
  %v168 = vpop.f32.mrf.mxu0
  %v169 = vadd.f32 %v149, %v168
  %170 = vmatmul.f32.gmra.mxu0 %v116
  %v171 = vpop.f32.mrf.mxu0
  %v172 = vadd.f32 %v149, %v171
  %173 = vmatmul.f32.gmra.mxu0 %v117
  %v174 = vpop.f32.mrf.mxu0
  %v175 = vadd.f32 %v149, %v174
  %176 = vmatmul.f32.gmra.mxu0 %v118
  %v177 = vpop.f32.mrf.mxu0
  %v178 = vadd.f32 %v149, %v177
  %179 = vmatmul.f32.gmra.mxu0 %v119
  %v180 = vpop.f32.mrf.mxu0
  %v181 = vadd.f32 %v149, %v180
  %182 = vmatmul.f32.gmra.mxu0 %v120
  %v183 = vpop.f32.mrf.mxu0
  %v184 = vadd.f32 %v149, %v183
  %185 = vmatmul.f32.gmra.mxu0 %v121
  %v186 = vpop.f32.mrf.mxu0
  %v187 = vadd.f32 %v149, %v186
  %188 = vmatmul.f32.gmra.mxu0 %v122
  %v189 = vpop.f32.mrf.mxu0
  %v190 = vadd.f32 %v149, %v189
  %191 = vmatmul.f32.gmra.mxu0 %v123
  %v192 = vpop.f32.mrf.mxu0
  %v193 = vadd.f32 %v149, %v192
  %194 = vmatmul.f32.gmra.mxu0 %v124
  %v195 = vpop.f32.mrf.mxu0
  %v196 = vadd.f32 %v149, %v195
  %197 = vmatmul.f32.gmra.mxu0 %v125
  %v198 = vpop.f32.mrf.mxu0
  %v199 = vadd.f32 %v149, %v198
  %200 = vmatmul.f32.gmra.mxu0 %v126
  %v201 = vpop.f32.mrf.mxu0
  %v202 = vadd.f32 %v149, %v201
  %203 = vmatmul.f32.gmra.mxu0 %v127
  %v204 = vpop.f32.mrf.mxu0
  %v205 = vadd.f32 %v149, %v204
  %206 = vmatmul.f32.gmra.mxu0 %v128
  %v207 = vpop.f32.mrf.mxu0
  %v208 = vadd.f32 %v149, %v207
  %209 = vmatmul.f32.gmra.mxu0 %v129
  %v210 = vpop.f32.mrf.mxu0
  %v211 = vadd.f32 %v149, %v210
  %212 = vmatmul.f32.gmra.mxu0 %v130
  %v213 = vpop.f32.mrf.mxu0
  %v214 = vadd.f32 %v149, %v213
  %215 = vdwg.mxu0
  %v216 = vxor.u32 %v169, 2147483648
  %v217 = vxor.u32 %v172, 2147483648
  %v218 = vxor.u32 %v175, 2147483648
  %v219 = vxor.u32 %v178, 2147483648
  %v220 = vxor.u32 %v181, 2147483648
  %v221 = vxor.u32 %v184, 2147483648
  %v222 = vxor.u32 %v187, 2147483648
  %v223 = vxor.u32 %v190, 2147483648
  %v224 = vxor.u32 %v193, 2147483648
  %v225 = vxor.u32 %v196, 2147483648
  %v226 = vxor.u32 %v199, 2147483648
  %v227 = vxor.u32 %v202, 2147483648
  %v228 = vxor.u32 %v205, 2147483648
  %v229 = vxor.u32 %v208, 2147483648
  %v230 = vxor.u32 %v211, 2147483648
  %v231 = vxor.u32 %v214, 2147483648
  %v232 = vmul.f32 %v216, 1.442695
  %v233 = vpow.pop %v232
  %v234 = vmul.f32 %v217, 1.442695
  %v235 = vpow.pop %v234
  %v236 = vmul.f32 %v218, 1.442695
  %v237 = vpow.pop %v236
  %v238 = vmul.f32 %v219, 1.442695
  %v239 = vpow.pop %v238
  %v240 = vmul.f32 %v220, 1.442695
  %v241 = vpow.pop %v240
  %v242 = vmul.f32 %v221, 1.442695
  %v243 = vpow.pop %v242
  %v244 = vmul.f32 %v222, 1.442695
  %v245 = vpow.pop %v244
  %v246 = vmul.f32 %v223, 1.442695
  %v247 = vpow.pop %v246
  %v248 = vmul.f32 %v224, 1.442695
  %v249 = vpow.pop %v248
  %v250 = vmul.f32 %v225, 1.442695
  %v251 = vpow.pop %v250
  %v252 = vmul.f32 %v226, 1.442695
  %v253 = vpow.pop %v252
  %v254 = vmul.f32 %v227, 1.442695
  %v255 = vpow.pop %v254
  %v256 = vmul.f32 %v228, 1.442695
  %v257 = vpow.pop %v256
  %v258 = vmul.f32 %v229, 1.442695
  %v259 = vpow.pop %v258
  %v260 = vmul.f32 %v230, 1.442695
  %v261 = vpow.pop %v260
  %v262 = vmul.f32 %v231, 1.442695
  %v263 = vpow.pop %v262
  %v264 = vadd.f32 %v233, 1.0
  %v265 = vadd.f32 %v235, 1.0
  %v266 = vadd.f32 %v237, 1.0
  %v267 = vadd.f32 %v239, 1.0
  %v268 = vadd.f32 %v241, 1.0
  %v269 = vadd.f32 %v243, 1.0
  %v270 = vadd.f32 %v245, 1.0
  %v271 = vadd.f32 %v247, 1.0
  %v272 = vadd.f32 %v249, 1.0
  %v273 = vadd.f32 %v251, 1.0
  %v274 = vadd.f32 %v253, 1.0
  %v275 = vadd.f32 %v255, 1.0
  %v276 = vadd.f32 %v257, 1.0
  %v277 = vadd.f32 %v259, 1.0
  %v278 = vadd.f32 %v261, 1.0
  %v279 = vadd.f32 %v263, 1.0
  %v280 = vrcp.pop %v264
  %v281 = vmul.f32 %v264, %v280
  %v282 = vsub.f32 1.0, %v281
  %v283 = vmul.f32 %v280, %v282
  %v284 = vadd.f32 %v280, %v283
  %vm285 = vweird.f32 %v264
  %vm286 = vweird.f32 %v280
  %vm287 = vmor %vm285, %vm286
  %v288 = vsel %vm287, %v280, %v284
  %v289 = vand.u32 2147483647, %v264
  %vm290 = vcmp.eq.f32.partialorder %v289, 8.507059e+37
  %v291 = vand.u32 %v264, 2147483648
  %v292 = vor.u32 1.1754944e-38, %v291
  %v293 = vsel %vm290, %v292, %v288
  %v294 = vmul.f32 1.0, %v293
  %v295 = vrcp.pop %v265
  %v296 = vmul.f32 %v265, %v295
  %v297 = vsub.f32 1.0, %v296
  %v298 = vmul.f32 %v295, %v297
  %v299 = vadd.f32 %v295, %v298
  %vm300 = vweird.f32 %v265
  %vm301 = vweird.f32 %v295
  %vm302 = vmor %vm300, %vm301
  %v303 = vsel %vm302, %v295, %v299
  %v304 = vand.u32 2147483647, %v265
  %vm305 = vcmp.eq.f32.partialorder %v304, 8.507059e+37
  %v306 = vand.u32 %v265, 2147483648
  %v307 = vor.u32 1.1754944e-38, %v306
  %v308 = vsel %vm305, %v307, %v303
  %v309 = vmul.f32 1.0, %v308
  %v310 = vrcp.pop %v266
  %v311 = vmul.f32 %v266, %v310
  %v312 = vsub.f32 1.0, %v311
  %v313 = vmul.f32 %v310, %v312
  %v314 = vadd.f32 %v310, %v313
  %vm315 = vweird.f32 %v266
  %vm316 = vweird.f32 %v310
  %vm317 = vmor %vm315, %vm316
  %v318 = vsel %vm317, %v310, %v314
  %v319 = vand.u32 2147483647, %v266
  %vm320 = vcmp.eq.f32.partialorder %v319, 8.507059e+37
  %v321 = vand.u32 %v266, 2147483648
  %v322 = vor.u32 1.1754944e-38, %v321
  %v323 = vsel %vm320, %v322, %v318
  %v324 = vmul.f32 1.0, %v323
  %v325 = vrcp.pop %v267
  %v326 = vmul.f32 %v267, %v325
  %v327 = vsub.f32 1.0, %v326
  %v328 = vmul.f32 %v325, %v327
  %v329 = vadd.f32 %v325, %v328
  %vm330 = vweird.f32 %v267
  %vm331 = vweird.f32 %v325
  %vm332 = vmor %vm330, %vm331
  %v333 = vsel %vm332, %v325, %v329
  %v334 = vand.u32 2147483647, %v267
  %vm335 = vcmp.eq.f32.partialorder %v334, 8.507059e+37
  %v336 = vand.u32 %v267, 2147483648
  %v337 = vor.u32 1.1754944e-38, %v336
  %v338 = vsel %vm335, %v337, %v333
  %v339 = vmul.f32 1.0, %v338
  %v340 = vrcp.pop %v268
  %v341 = vmul.f32 %v268, %v340
  %v342 = vsub.f32 1.0, %v341
  %v343 = vmul.f32 %v340, %v342
  %v344 = vadd.f32 %v340, %v343
  %vm345 = vweird.f32 %v268
  %vm346 = vweird.f32 %v340
  %vm347 = vmor %vm345, %vm346
  %v348 = vsel %vm347, %v340, %v344
  %v349 = vand.u32 2147483647, %v268
  %vm350 = vcmp.eq.f32.partialorder %v349, 8.507059e+37
  %v351 = vand.u32 %v268, 2147483648
  %v352 = vor.u32 1.1754944e-38, %v351
  %v353 = vsel %vm350, %v352, %v348
  %v354 = vmul.f32 1.0, %v353
  %v355 = vrcp.pop %v269
  %v356 = vmul.f32 %v269, %v355
  %v357 = vsub.f32 1.0, %v356
  %v358 = vmul.f32 %v355, %v357
  %v359 = vadd.f32 %v355, %v358
  %vm360 = vweird.f32 %v269
  %vm361 = vweird.f32 %v355
  %vm362 = vmor %vm360, %vm361
  %v363 = vsel %vm362, %v355, %v359
  %v364 = vand.u32 2147483647, %v269
  %vm365 = vcmp.eq.f32.partialorder %v364, 8.507059e+37
  %v366 = vand.u32 %v269, 2147483648
  %v367 = vor.u32 1.1754944e-38, %v366
  %v368 = vsel %vm365, %v367, %v363
  %v369 = vmul.f32 1.0, %v368
  %v370 = vrcp.pop %v270
  %v371 = vmul.f32 %v270, %v370
  %v372 = vsub.f32 1.0, %v371
  %v373 = vmul.f32 %v370, %v372
  %v374 = vadd.f32 %v370, %v373
  %vm375 = vweird.f32 %v270
  %vm376 = vweird.f32 %v370
  %vm377 = vmor %vm375, %vm376
  %v378 = vsel %vm377, %v370, %v374
  %v379 = vand.u32 2147483647, %v270
  %vm380 = vcmp.eq.f32.partialorder %v379, 8.507059e+37
  %v381 = vand.u32 %v270, 2147483648
  %v382 = vor.u32 1.1754944e-38, %v381
  %v383 = vsel %vm380, %v382, %v378
  %v384 = vmul.f32 1.0, %v383
  %v385 = vrcp.pop %v271
  %v386 = vmul.f32 %v271, %v385
  %v387 = vsub.f32 1.0, %v386
  %v388 = vmul.f32 %v385, %v387
  %v389 = vadd.f32 %v385, %v388
  %vm390 = vweird.f32 %v271
  %vm391 = vweird.f32 %v385
  %vm392 = vmor %vm390, %vm391
  %v393 = vsel %vm392, %v385, %v389
  %v394 = vand.u32 2147483647, %v271
  %vm395 = vcmp.eq.f32.partialorder %v394, 8.507059e+37
  %v396 = vand.u32 %v271, 2147483648
  %v397 = vor.u32 1.1754944e-38, %v396
  %v398 = vsel %vm395, %v397, %v393
  %v399 = vmul.f32 1.0, %v398
  %v400 = vrcp.pop %v272
  %v401 = vmul.f32 %v272, %v400
  %v402 = vsub.f32 1.0, %v401
  %v403 = vmul.f32 %v400, %v402
  %v404 = vadd.f32 %v400, %v403
  %vm405 = vweird.f32 %v272
  %vm406 = vweird.f32 %v400
  %vm407 = vmor %vm405, %vm406
  %v408 = vsel %vm407, %v400, %v404
  %v409 = vand.u32 2147483647, %v272
  %vm410 = vcmp.eq.f32.partialorder %v409, 8.507059e+37
  %v411 = vand.u32 %v272, 2147483648
  %v412 = vor.u32 1.1754944e-38, %v411
  %v413 = vsel %vm410, %v412, %v408
  %v414 = vmul.f32 1.0, %v413
  %v415 = vrcp.pop %v273
  %v416 = vmul.f32 %v273, %v415
  %v417 = vsub.f32 1.0, %v416
  %v418 = vmul.f32 %v415, %v417
  %v419 = vadd.f32 %v415, %v418
  %vm420 = vweird.f32 %v273
  %vm421 = vweird.f32 %v415
  %vm422 = vmor %vm420, %vm421
  %v423 = vsel %vm422, %v415, %v419
  %v424 = vand.u32 2147483647, %v273
  %vm425 = vcmp.eq.f32.partialorder %v424, 8.507059e+37
  %v426 = vand.u32 %v273, 2147483648
  %v427 = vor.u32 1.1754944e-38, %v426
  %v428 = vsel %vm425, %v427, %v423
  %v429 = vmul.f32 1.0, %v428
  %v430 = vrcp.pop %v274
  %v431 = vmul.f32 %v274, %v430
  %v432 = vsub.f32 1.0, %v431
  %v433 = vmul.f32 %v430, %v432
  %v434 = vadd.f32 %v430, %v433
  %vm435 = vweird.f32 %v274
  %vm436 = vweird.f32 %v430
  %vm437 = vmor %vm435, %vm436
  %v438 = vsel %vm437, %v430, %v434
  %v439 = vand.u32 2147483647, %v274
  %vm440 = vcmp.eq.f32.partialorder %v439, 8.507059e+37
  %v441 = vand.u32 %v274, 2147483648
  %v442 = vor.u32 1.1754944e-38, %v441
  %v443 = vsel %vm440, %v442, %v438
  %v444 = vmul.f32 1.0, %v443
  %v445 = vrcp.pop %v275
  %v446 = vmul.f32 %v275, %v445
  %v447 = vsub.f32 1.0, %v446
  %v448 = vmul.f32 %v445, %v447
  %v449 = vadd.f32 %v445, %v448
  %vm450 = vweird.f32 %v275
  %vm451 = vweird.f32 %v445
  %vm452 = vmor %vm450, %vm451
  %v453 = vsel %vm452, %v445, %v449
  %v454 = vand.u32 2147483647, %v275
  %vm455 = vcmp.eq.f32.partialorder %v454, 8.507059e+37
  %v456 = vand.u32 %v275, 2147483648
  %v457 = vor.u32 1.1754944e-38, %v456
  %v458 = vsel %vm455, %v457, %v453
  %v459 = vmul.f32 1.0, %v458
  %v460 = vrcp.pop %v276
  %v461 = vmul.f32 %v276, %v460
  %v462 = vsub.f32 1.0, %v461
  %v463 = vmul.f32 %v460, %v462
  %v464 = vadd.f32 %v460, %v463
  %vm465 = vweird.f32 %v276
  %vm466 = vweird.f32 %v460
  %vm467 = vmor %vm465, %vm466
  %v468 = vsel %vm467, %v460, %v464
  %v469 = vand.u32 2147483647, %v276
  %vm470 = vcmp.eq.f32.partialorder %v469, 8.507059e+37
  %v471 = vand.u32 %v276, 2147483648
  %v472 = vor.u32 1.1754944e-38, %v471
  %v473 = vsel %vm470, %v472, %v468
  %v474 = vmul.f32 1.0, %v473
  %v475 = vrcp.pop %v277
  %v476 = vmul.f32 %v277, %v475
  %v477 = vsub.f32 1.0, %v476
  %v478 = vmul.f32 %v475, %v477
  %v479 = vadd.f32 %v475, %v478
  %vm480 = vweird.f32 %v277
  %vm481 = vweird.f32 %v475
  %vm482 = vmor %vm480, %vm481
  %v483 = vsel %vm482, %v475, %v479
  %v484 = vand.u32 2147483647, %v277
  %vm485 = vcmp.eq.f32.partialorder %v484, 8.507059e+37
  %v486 = vand.u32 %v277, 2147483648
  %v487 = vor.u32 1.1754944e-38, %v486
  %v488 = vsel %vm485, %v487, %v483
  %v489 = vmul.f32 1.0, %v488
  %v490 = vrcp.pop %v278
  %v491 = vmul.f32 %v278, %v490
  %v492 = vsub.f32 1.0, %v491
  %v493 = vmul.f32 %v490, %v492
  %v494 = vadd.f32 %v490, %v493
  %vm495 = vweird.f32 %v278
  %vm496 = vweird.f32 %v490
  %vm497 = vmor %vm495, %vm496
  %v498 = vsel %vm497, %v490, %v494
  %v499 = vand.u32 2147483647, %v278
  %vm500 = vcmp.eq.f32.partialorder %v499, 8.507059e+37
  %v501 = vand.u32 %v278, 2147483648
  %v502 = vor.u32 1.1754944e-38, %v501
  %v503 = vsel %vm500, %v502, %v498
  %v504 = vmul.f32 1.0, %v503
  %v505 = vrcp.pop %v279
  %v506 = vmul.f32 %v279, %v505
  %v507 = vsub.f32 1.0, %v506
  %v508 = vmul.f32 %v505, %v507
  %v509 = vadd.f32 %v505, %v508
  %vm510 = vweird.f32 %v279
  %vm511 = vweird.f32 %v505
  %vm512 = vmor %vm510, %vm511
  %v513 = vsel %vm512, %v505, %v509
  %v514 = vand.u32 2147483647, %v279
  %vm515 = vcmp.eq.f32.partialorder %v514, 8.507059e+37
  %v516 = vand.u32 %v279, 2147483648
  %v517 = vor.u32 1.1754944e-38, %v516
  %v518 = vsel %vm515, %v517, %v513
  %v519 = vmul.f32 1.0, %v518
  %s520 = scalar_lea.vmem %s5, 128
  %v521 = vld [vmem:[%s520] sm:$0xff]
  %v522 = vld [vmem:[%s520 + $0x8] sm:$0xff]
  %v523 = vld [vmem:[%s520 + $0x10] sm:$0xff]
  %v524 = vld [vmem:[%s520 + $0x18] sm:$0xff]
  %v525 = vld [vmem:[%s520 + $0x20] sm:$0xff]
  %v526 = vld [vmem:[%s520 + $0x28] sm:$0xff]
  %v527 = vld [vmem:[%s520 + $0x30] sm:$0xff]
  %v528 = vld [vmem:[%s520 + $0x38] sm:$0xff]
  %v529 = vld [vmem:[%s520 + $0x40] sm:$0xff]
  %v530 = vld [vmem:[%s520 + $0x48] sm:$0xff]
  %v531 = vld [vmem:[%s520 + $0x50] sm:$0xff]
  %v532 = vld [vmem:[%s520 + $0x58] sm:$0xff]
  %v533 = vld [vmem:[%s520 + $0x60] sm:$0xff]
  %v534 = vld [vmem:[%s520 + $0x68] sm:$0xff]
  %v535 = vld [vmem:[%s520 + $0x70] sm:$0xff]
  %v536 = vld [vmem:[%s520 + $0x78] sm:$0xff]
  %s537 = scalar_lea.vmem %s6, 1
  %v538 = vld [vmem:[%s537] sm:$0x1]
  %v540 = vperm.slane %v538, 0
  %542 = vmatpush.msra.mxu0 %v536
  %543 = vmatpush.msra.mxu0 %v535
  %544 = vmatpush.msra.mxu0 %v534
  %545 = vmatpush.msra.mxu0 %v533
  %546 = vmatpush.msra.mxu0 %v532
  %547 = vmatpush.msra.mxu0 %v531
  %548 = vmatpush.msra.mxu0 %v530
  %549 = vmatpush.msra.mxu0 %v529
  %550 = vmatpush.msra.mxu0 %v528
  %551 = vmatpush.msra.mxu0 %v527
  %552 = vmatpush.msra.mxu0 %v526
  %553 = vmatpush.msra.mxu0 %v525
  %554 = vmatpush.msra.mxu0 %v524
  %555 = vmatpush.msra.mxu0 %v523
  %556 = vmatpush.msra.mxu0 %v522
  %557 = vmatpush.msra.mxu0 %v521
  %558 = vmatmul.f32.gmra.mxu0 %v115
  %v559 = vpop.f32.mrf.mxu0
  %v560 = vadd.f32 %v540, %v559
  %561 = vmatmul.f32.gmra.mxu0 %v116
  %v562 = vpop.f32.mrf.mxu0
  %v563 = vadd.f32 %v540, %v562
  %564 = vmatmul.f32.gmra.mxu0 %v117
  %v565 = vpop.f32.mrf.mxu0
  %v566 = vadd.f32 %v540, %v565
  %567 = vmatmul.f32.gmra.mxu0 %v118
  %v568 = vpop.f32.mrf.mxu0
  %v569 = vadd.f32 %v540, %v568
  %570 = vmatmul.f32.gmra.mxu0 %v119
  %v571 = vpop.f32.mrf.mxu0
  %v572 = vadd.f32 %v540, %v571
  %573 = vmatmul.f32.gmra.mxu0 %v120
  %v574 = vpop.f32.mrf.mxu0
  %v575 = vadd.f32 %v540, %v574
  %576 = vmatmul.f32.gmra.mxu0 %v121
  %v577 = vpop.f32.mrf.mxu0
  %v578 = vadd.f32 %v540, %v577
  %579 = vmatmul.f32.gmra.mxu0 %v122
  %v580 = vpop.f32.mrf.mxu0
  %v581 = vadd.f32 %v540, %v580
  %582 = vmatmul.f32.gmra.mxu0 %v123
  %v583 = vpop.f32.mrf.mxu0
  %v584 = vadd.f32 %v540, %v583
  %585 = vmatmul.f32.gmra.mxu0 %v124
  %v586 = vpop.f32.mrf.mxu0
  %v587 = vadd.f32 %v540, %v586
  %588 = vmatmul.f32.gmra.mxu0 %v125
  %v589 = vpop.f32.mrf.mxu0
  %v590 = vadd.f32 %v540, %v589
  %591 = vmatmul.f32.gmra.mxu0 %v126
  %v592 = vpop.f32.mrf.mxu0
  %v593 = vadd.f32 %v540, %v592
  %594 = vmatmul.f32.gmra.mxu0 %v127
  %v595 = vpop.f32.mrf.mxu0
  %v596 = vadd.f32 %v540, %v595
  %597 = vmatmul.f32.gmra.mxu0 %v128
  %v598 = vpop.f32.mrf.mxu0
  %v599 = vadd.f32 %v540, %v598
  %600 = vmatmul.f32.gmra.mxu0 %v129
  %v601 = vpop.f32.mrf.mxu0
  %v602 = vadd.f32 %v540, %v601
  %603 = vmatmul.f32.gmra.mxu0 %v130
  %v604 = vpop.f32.mrf.mxu0
  %v605 = vadd.f32 %v540, %v604
  %606 = vdwg.mxu0
  %v607 = vxor.u32 %v560, 2147483648
  %v608 = vxor.u32 %v563, 2147483648
  %v609 = vxor.u32 %v566, 2147483648
  %v610 = vxor.u32 %v569, 2147483648
  %v611 = vxor.u32 %v572, 2147483648
  %v612 = vxor.u32 %v575, 2147483648
  %v613 = vxor.u32 %v578, 2147483648
  %v614 = vxor.u32 %v581, 2147483648
  %v615 = vxor.u32 %v584, 2147483648
  %v616 = vxor.u32 %v587, 2147483648
  %v617 = vxor.u32 %v590, 2147483648
  %v618 = vxor.u32 %v593, 2147483648
  %v619 = vxor.u32 %v596, 2147483648
  %v620 = vxor.u32 %v599, 2147483648
  %v621 = vxor.u32 %v602, 2147483648
  %v622 = vxor.u32 %v605, 2147483648
  %v623 = vmul.f32 %v607, 1.442695
  %v624 = vpow.pop %v623
  %v625 = vmul.f32 %v608, 1.442695
  %v626 = vpow.pop %v625
  %v627 = vmul.f32 %v609, 1.442695
  %v628 = vpow.pop %v627
  %v629 = vmul.f32 %v610, 1.442695
  %v630 = vpow.pop %v629
  %v631 = vmul.f32 %v611, 1.442695
  %v632 = vpow.pop %v631
  %v633 = vmul.f32 %v612, 1.442695
  %v634 = vpow.pop %v633
  %v635 = vmul.f32 %v613, 1.442695
  %v636 = vpow.pop %v635
  %v637 = vmul.f32 %v614, 1.442695
  %v638 = vpow.pop %v637
  %v639 = vmul.f32 %v615, 1.442695
  %v640 = vpow.pop %v639
  %v641 = vmul.f32 %v616, 1.442695
  %v642 = vpow.pop %v641
  %v643 = vmul.f32 %v617, 1.442695
  %v644 = vpow.pop %v643
  %v645 = vmul.f32 %v618, 1.442695
  %v646 = vpow.pop %v645
  %v647 = vmul.f32 %v619, 1.442695
  %v648 = vpow.pop %v647
  %v649 = vmul.f32 %v620, 1.442695
  %v650 = vpow.pop %v649
  %v651 = vmul.f32 %v621, 1.442695
  %v652 = vpow.pop %v651
  %v653 = vmul.f32 %v622, 1.442695
  %v654 = vpow.pop %v653
  %v655 = vadd.f32 %v624, 1.0
  %v656 = vadd.f32 %v626, 1.0
  %v657 = vadd.f32 %v628, 1.0
  %v658 = vadd.f32 %v630, 1.0
  %v659 = vadd.f32 %v632, 1.0
  %v660 = vadd.f32 %v634, 1.0
  %v661 = vadd.f32 %v636, 1.0
  %v662 = vadd.f32 %v638, 1.0
  %v663 = vadd.f32 %v640, 1.0
  %v664 = vadd.f32 %v642, 1.0
  %v665 = vadd.f32 %v644, 1.0
  %v666 = vadd.f32 %v646, 1.0
  %v667 = vadd.f32 %v648, 1.0
  %v668 = vadd.f32 %v650, 1.0
  %v669 = vadd.f32 %v652, 1.0
  %v670 = vadd.f32 %v654, 1.0
  %v671 = vrcp.pop %v655
  %v672 = vmul.f32 %v655, %v671
  %v673 = vsub.f32 1.0, %v672
  %v674 = vmul.f32 %v671, %v673
  %v675 = vadd.f32 %v671, %v674
  %vm676 = vweird.f32 %v655
  %vm677 = vweird.f32 %v671
  %vm678 = vmor %vm676, %vm677
  %v679 = vsel %vm678, %v671, %v675
  %v680 = vand.u32 2147483647, %v655
  %vm681 = vcmp.eq.f32.partialorder %v680, 8.507059e+37
  %v682 = vand.u32 %v655, 2147483648
  %v683 = vor.u32 1.1754944e-38, %v682
  %v684 = vsel %vm681, %v683, %v679
  %v685 = vmul.f32 1.0, %v684
  %v686 = vrcp.pop %v656
  %v687 = vmul.f32 %v656, %v686
  %v688 = vsub.f32 1.0, %v687
  %v689 = vmul.f32 %v686, %v688
  %v690 = vadd.f32 %v686, %v689
  %vm691 = vweird.f32 %v656
  %vm692 = vweird.f32 %v686
  %vm693 = vmor %vm691, %vm692
  %v694 = vsel %vm693, %v686, %v690
  %v695 = vand.u32 2147483647, %v656
  %vm696 = vcmp.eq.f32.partialorder %v695, 8.507059e+37
  %v697 = vand.u32 %v656, 2147483648
  %v698 = vor.u32 1.1754944e-38, %v697
  %v699 = vsel %vm696, %v698, %v694
  %v700 = vmul.f32 1.0, %v699
  %v701 = vrcp.pop %v657
  %v702 = vmul.f32 %v657, %v701
  %v703 = vsub.f32 1.0, %v702
  %v704 = vmul.f32 %v701, %v703
  %v705 = vadd.f32 %v701, %v704
  %vm706 = vweird.f32 %v657
  %vm707 = vweird.f32 %v701
  %vm708 = vmor %vm706, %vm707
  %v709 = vsel %vm708, %v701, %v705
  %v710 = vand.u32 2147483647, %v657
  %vm711 = vcmp.eq.f32.partialorder %v710, 8.507059e+37
  %v712 = vand.u32 %v657, 2147483648
  %v713 = vor.u32 1.1754944e-38, %v712
  %v714 = vsel %vm711, %v713, %v709
  %v715 = vmul.f32 1.0, %v714
  %v716 = vrcp.pop %v658
  %v717 = vmul.f32 %v658, %v716
  %v718 = vsub.f32 1.0, %v717
  %v719 = vmul.f32 %v716, %v718
  %v720 = vadd.f32 %v716, %v719
  %vm721 = vweird.f32 %v658
  %vm722 = vweird.f32 %v716
  %vm723 = vmor %vm721, %vm722
  %v724 = vsel %vm723, %v716, %v720
  %v725 = vand.u32 2147483647, %v658
  %vm726 = vcmp.eq.f32.partialorder %v725, 8.507059e+37
  %v727 = vand.u32 %v658, 2147483648
  %v728 = vor.u32 1.1754944e-38, %v727
  %v729 = vsel %vm726, %v728, %v724
  %v730 = vmul.f32 1.0, %v729
  %v731 = vrcp.pop %v659
  %v732 = vmul.f32 %v659, %v731
  %v733 = vsub.f32 1.0, %v732
  %v734 = vmul.f32 %v731, %v733
  %v735 = vadd.f32 %v731, %v734
  %vm736 = vweird.f32 %v659
  %vm737 = vweird.f32 %v731
  %vm738 = vmor %vm736, %vm737
  %v739 = vsel %vm738, %v731, %v735
  %v740 = vand.u32 2147483647, %v659
  %vm741 = vcmp.eq.f32.partialorder %v740, 8.507059e+37
  %v742 = vand.u32 %v659, 2147483648
  %v743 = vor.u32 1.1754944e-38, %v742
  %v744 = vsel %vm741, %v743, %v739
  %v745 = vmul.f32 1.0, %v744
  %v746 = vrcp.pop %v660
  %v747 = vmul.f32 %v660, %v746
  %v748 = vsub.f32 1.0, %v747
  %v749 = vmul.f32 %v746, %v748
  %v750 = vadd.f32 %v746, %v749
  %vm751 = vweird.f32 %v660
  %vm752 = vweird.f32 %v746
  %vm753 = vmor %vm751, %vm752
  %v754 = vsel %vm753, %v746, %v750
  %v755 = vand.u32 2147483647, %v660
  %vm756 = vcmp.eq.f32.partialorder %v755, 8.507059e+37
  %v757 = vand.u32 %v660, 2147483648
  %v758 = vor.u32 1.1754944e-38, %v757
  %v759 = vsel %vm756, %v758, %v754
  %v760 = vmul.f32 1.0, %v759
  %v761 = vrcp.pop %v661
  %v762 = vmul.f32 %v661, %v761
  %v763 = vsub.f32 1.0, %v762
  %v764 = vmul.f32 %v761, %v763
  %v765 = vadd.f32 %v761, %v764
  %vm766 = vweird.f32 %v661
  %vm767 = vweird.f32 %v761
  %vm768 = vmor %vm766, %vm767
  %v769 = vsel %vm768, %v761, %v765
  %v770 = vand.u32 2147483647, %v661
  %vm771 = vcmp.eq.f32.partialorder %v770, 8.507059e+37
  %v772 = vand.u32 %v661, 2147483648
  %v773 = vor.u32 1.1754944e-38, %v772
  %v774 = vsel %vm771, %v773, %v769
  %v775 = vmul.f32 1.0, %v774
  %v776 = vrcp.pop %v662
  %v777 = vmul.f32 %v662, %v776
  %v778 = vsub.f32 1.0, %v777
  %v779 = vmul.f32 %v776, %v778
  %v780 = vadd.f32 %v776, %v779
  %vm781 = vweird.f32 %v662
  %vm782 = vweird.f32 %v776
  %vm783 = vmor %vm781, %vm782
  %v784 = vsel %vm783, %v776, %v780
  %v785 = vand.u32 2147483647, %v662
  %vm786 = vcmp.eq.f32.partialorder %v785, 8.507059e+37
  %v787 = vand.u32 %v662, 2147483648
  %v788 = vor.u32 1.1754944e-38, %v787
  %v789 = vsel %vm786, %v788, %v784
  %v790 = vmul.f32 1.0, %v789
  %v791 = vrcp.pop %v663
  %v792 = vmul.f32 %v663, %v791
  %v793 = vsub.f32 1.0, %v792
  %v794 = vmul.f32 %v791, %v793
  %v795 = vadd.f32 %v791, %v794
  %vm796 = vweird.f32 %v663
  %vm797 = vweird.f32 %v791
  %vm798 = vmor %vm796, %vm797
  %v799 = vsel %vm798, %v791, %v795
  %v800 = vand.u32 2147483647, %v663
  %vm801 = vcmp.eq.f32.partialorder %v800, 8.507059e+37
  %v802 = vand.u32 %v663, 2147483648
  %v803 = vor.u32 1.1754944e-38, %v802
  %v804 = vsel %vm801, %v803, %v799
  %v805 = vmul.f32 1.0, %v804
  %v806 = vrcp.pop %v664
  %v807 = vmul.f32 %v664, %v806
  %v808 = vsub.f32 1.0, %v807
  %v809 = vmul.f32 %v806, %v808
  %v810 = vadd.f32 %v806, %v809
  %vm811 = vweird.f32 %v664
  %vm812 = vweird.f32 %v806
  %vm813 = vmor %vm811, %vm812
  %v814 = vsel %vm813, %v806, %v810
  %v815 = vand.u32 2147483647, %v664
  %vm816 = vcmp.eq.f32.partialorder %v815, 8.507059e+37
  %v817 = vand.u32 %v664, 2147483648
  %v818 = vor.u32 1.1754944e-38, %v817
  %v819 = vsel %vm816, %v818, %v814
  %v820 = vmul.f32 1.0, %v819
  %v821 = vrcp.pop %v665
  %v822 = vmul.f32 %v665, %v821
  %v823 = vsub.f32 1.0, %v822
  %v824 = vmul.f32 %v821, %v823
  %v825 = vadd.f32 %v821, %v824
  %vm826 = vweird.f32 %v665
  %vm827 = vweird.f32 %v821
  %vm828 = vmor %vm826, %vm827
  %v829 = vsel %vm828, %v821, %v825
  %v830 = vand.u32 2147483647, %v665
  %vm831 = vcmp.eq.f32.partialorder %v830, 8.507059e+37
  %v832 = vand.u32 %v665, 2147483648
  %v833 = vor.u32 1.1754944e-38, %v832
  %v834 = vsel %vm831, %v833, %v829
  %v835 = vmul.f32 1.0, %v834
  %v836 = vrcp.pop %v666
  %v837 = vmul.f32 %v666, %v836
  %v838 = vsub.f32 1.0, %v837
  %v839 = vmul.f32 %v836, %v838
  %v840 = vadd.f32 %v836, %v839
  %vm841 = vweird.f32 %v666
  %vm842 = vweird.f32 %v836
  %vm843 = vmor %vm841, %vm842
  %v844 = vsel %vm843, %v836, %v840
  %v845 = vand.u32 2147483647, %v666
  %vm846 = vcmp.eq.f32.partialorder %v845, 8.507059e+37
  %v847 = vand.u32 %v666, 2147483648
  %v848 = vor.u32 1.1754944e-38, %v847
  %v849 = vsel %vm846, %v848, %v844
  %v850 = vmul.f32 1.0, %v849
  %v851 = vrcp.pop %v667
  %v852 = vmul.f32 %v667, %v851
  %v853 = vsub.f32 1.0, %v852
  %v854 = vmul.f32 %v851, %v853
  %v855 = vadd.f32 %v851, %v854
  %vm856 = vweird.f32 %v667
  %vm857 = vweird.f32 %v851
  %vm858 = vmor %vm856, %vm857
  %v859 = vsel %vm858, %v851, %v855
  %v860 = vand.u32 2147483647, %v667
  %vm861 = vcmp.eq.f32.partialorder %v860, 8.507059e+37
  %v862 = vand.u32 %v667, 2147483648
  %v863 = vor.u32 1.1754944e-38, %v862
  %v864 = vsel %vm861, %v863, %v859
  %v865 = vmul.f32 1.0, %v864
  %v866 = vrcp.pop %v668
  %v867 = vmul.f32 %v668, %v866
  %v868 = vsub.f32 1.0, %v867
  %v869 = vmul.f32 %v866, %v868
  %v870 = vadd.f32 %v866, %v869
  %vm871 = vweird.f32 %v668
  %vm872 = vweird.f32 %v866
  %vm873 = vmor %vm871, %vm872
  %v874 = vsel %vm873, %v866, %v870
  %v875 = vand.u32 2147483647, %v668
  %vm876 = vcmp.eq.f32.partialorder %v875, 8.507059e+37
  %v877 = vand.u32 %v668, 2147483648
  %v878 = vor.u32 1.1754944e-38, %v877
  %v879 = vsel %vm876, %v878, %v874
  %v880 = vmul.f32 1.0, %v879
  %v881 = vrcp.pop %v669
  %v882 = vmul.f32 %v669, %v881
  %v883 = vsub.f32 1.0, %v882
  %v884 = vmul.f32 %v881, %v883
  %v885 = vadd.f32 %v881, %v884
  %vm886 = vweird.f32 %v669
  %vm887 = vweird.f32 %v881
  %vm888 = vmor %vm886, %vm887
  %v889 = vsel %vm888, %v881, %v885
  %v890 = vand.u32 2147483647, %v669
  %vm891 = vcmp.eq.f32.partialorder %v890, 8.507059e+37
  %v892 = vand.u32 %v669, 2147483648
  %v893 = vor.u32 1.1754944e-38, %v892
  %v894 = vsel %vm891, %v893, %v889
  %v895 = vmul.f32 1.0, %v894
  %v896 = vrcp.pop %v670
  %v897 = vmul.f32 %v670, %v896
  %v898 = vsub.f32 1.0, %v897
  %v899 = vmul.f32 %v896, %v898
  %v900 = vadd.f32 %v896, %v899
  %vm901 = vweird.f32 %v670
  %vm902 = vweird.f32 %v896
  %vm903 = vmor %vm901, %vm902
  %v904 = vsel %vm903, %v896, %v900
  %v905 = vand.u32 2147483647, %v670
  %vm906 = vcmp.eq.f32.partialorder %v905, 8.507059e+37
  %v907 = vand.u32 %v670, 2147483648
  %v908 = vor.u32 1.1754944e-38, %v907
  %v909 = vsel %vm906, %v908, %v904
  %v910 = vmul.f32 1.0, %v909
  %v911 = vld [vmem:[%s7] sm:$0xff]
  %v912 = vld [vmem:[%s7 + $0x8] sm:$0xff]
  %v913 = vld [vmem:[%s7 + $0x10] sm:$0xff]
  %v914 = vld [vmem:[%s7 + $0x18] sm:$0xff]
  %v915 = vld [vmem:[%s7 + $0x20] sm:$0xff]
  %v916 = vld [vmem:[%s7 + $0x28] sm:$0xff]
  %v917 = vld [vmem:[%s7 + $0x30] sm:$0xff]
  %v918 = vld [vmem:[%s7 + $0x38] sm:$0xff]
  %v919 = vld [vmem:[%s7 + $0x40] sm:$0xff]
  %v920 = vld [vmem:[%s7 + $0x48] sm:$0xff]
  %v921 = vld [vmem:[%s7 + $0x50] sm:$0xff]
  %v922 = vld [vmem:[%s7 + $0x58] sm:$0xff]
  %v923 = vld [vmem:[%s7 + $0x60] sm:$0xff]
  %v924 = vld [vmem:[%s7 + $0x68] sm:$0xff]
  %v925 = vld [vmem:[%s7 + $0x70] sm:$0xff]
  %v926 = vld [vmem:[%s7 + $0x78] sm:$0xff]
  %v927 = vld [vmem:[%s8] sm:$0x1]
  %v929 = vperm.slane %v927, 0
  %931 = vmatpush.msra.mxu0 %v926
  %932 = vmatpush.msra.mxu0 %v925
  %933 = vmatpush.msra.mxu0 %v924
  %934 = vmatpush.msra.mxu0 %v923
  %935 = vmatpush.msra.mxu0 %v922
  %936 = vmatpush.msra.mxu0 %v921
  %937 = vmatpush.msra.mxu0 %v920
  %938 = vmatpush.msra.mxu0 %v919
  %939 = vmatpush.msra.mxu0 %v918
  %940 = vmatpush.msra.mxu0 %v917
  %941 = vmatpush.msra.mxu0 %v916
  %942 = vmatpush.msra.mxu0 %v915
  %943 = vmatpush.msra.mxu0 %v914
  %944 = vmatpush.msra.mxu0 %v913
  %945 = vmatpush.msra.mxu0 %v912
  %946 = vmatpush.msra.mxu0 %v911
  %947 = vmatmul.f32.gmra.mxu0 %v115
  %v948 = vpop.f32.mrf.mxu0
  %v949 = vadd.f32 %v929, %v948
  %950 = vmatmul.f32.gmra.mxu0 %v116
  %v951 = vpop.f32.mrf.mxu0
  %v952 = vadd.f32 %v929, %v951
  %953 = vmatmul.f32.gmra.mxu0 %v117
  %v954 = vpop.f32.mrf.mxu0
  %v955 = vadd.f32 %v929, %v954
  %956 = vmatmul.f32.gmra.mxu0 %v118
  %v957 = vpop.f32.mrf.mxu0
  %v958 = vadd.f32 %v929, %v957
  %959 = vmatmul.f32.gmra.mxu0 %v119
  %v960 = vpop.f32.mrf.mxu0
  %v961 = vadd.f32 %v929, %v960
  %962 = vmatmul.f32.gmra.mxu0 %v120
  %v963 = vpop.f32.mrf.mxu0
  %v964 = vadd.f32 %v929, %v963
  %965 = vmatmul.f32.gmra.mxu0 %v121
  %v966 = vpop.f32.mrf.mxu0
  %v967 = vadd.f32 %v929, %v966
  %968 = vmatmul.f32.gmra.mxu0 %v122
  %v969 = vpop.f32.mrf.mxu0
  %v970 = vadd.f32 %v929, %v969
  %971 = vmatmul.f32.gmra.mxu0 %v123
  %v972 = vpop.f32.mrf.mxu0
  %v973 = vadd.f32 %v929, %v972
  %974 = vmatmul.f32.gmra.mxu0 %v124
  %v975 = vpop.f32.mrf.mxu0
  %v976 = vadd.f32 %v929, %v975
  %977 = vmatmul.f32.gmra.mxu0 %v125
  %v978 = vpop.f32.mrf.mxu0
  %v979 = vadd.f32 %v929, %v978
  %980 = vmatmul.f32.gmra.mxu0 %v126
  %v981 = vpop.f32.mrf.mxu0
  %v982 = vadd.f32 %v929, %v981
  %983 = vmatmul.f32.gmra.mxu0 %v127
  %v984 = vpop.f32.mrf.mxu0
  %v985 = vadd.f32 %v929, %v984
  %986 = vmatmul.f32.gmra.mxu0 %v128
  %v987 = vpop.f32.mrf.mxu0
  %v988 = vadd.f32 %v929, %v987
  %989 = vmatmul.f32.gmra.mxu0 %v129
  %v990 = vpop.f32.mrf.mxu0
  %v991 = vadd.f32 %v929, %v990
  %992 = vmatmul.f32.gmra.mxu0 %v130
  %v993 = vpop.f32.mrf.mxu0
  %v994 = vadd.f32 %v929, %v993
  %995 = vdwg.mxu0
  %v996 = vld [vmem:[%s9] sm:$0xff]
  %v997 = vld [vmem:[%s9 + $0x8] sm:$0xff]
  %v998 = vld [vmem:[%s9 + $0x10] sm:$0xff]
  %v999 = vld [vmem:[%s9 + $0x18] sm:$0xff]
  %v1000 = vld [vmem:[%s9 + $0x20] sm:$0xff]
  %v1001 = vld [vmem:[%s9 + $0x28] sm:$0xff]
  %v1002 = vld [vmem:[%s9 + $0x30] sm:$0xff]
  %v1003 = vld [vmem:[%s9 + $0x38] sm:$0xff]
  %v1004 = vld [vmem:[%s9 + $0x40] sm:$0xff]
  %v1005 = vld [vmem:[%s9 + $0x48] sm:$0xff]
  %v1006 = vld [vmem:[%s9 + $0x50] sm:$0xff]
  %v1007 = vld [vmem:[%s9 + $0x58] sm:$0xff]
  %v1008 = vld [vmem:[%s9 + $0x60] sm:$0xff]
  %v1009 = vld [vmem:[%s9 + $0x68] sm:$0xff]
  %v1010 = vld [vmem:[%s9 + $0x70] sm:$0xff]
  %v1011 = vld [vmem:[%s9 + $0x78] sm:$0xff]
  %v1012 = vld [vmem:[%s10] sm:$0x1]
  %v1014 = vperm.slane %v1012, 0
  %1016 = vmatpush.msra.mxu0 %v1011
  %1017 = vmatpush.msra.mxu0 %v1010
  %1018 = vmatpush.msra.mxu0 %v1009
  %1019 = vmatpush.msra.mxu0 %v1008
  %1020 = vmatpush.msra.mxu0 %v1007
  %1021 = vmatpush.msra.mxu0 %v1006
  %1022 = vmatpush.msra.mxu0 %v1005
  %1023 = vmatpush.msra.mxu0 %v1004
  %1024 = vmatpush.msra.mxu0 %v1003
  %1025 = vmatpush.msra.mxu0 %v1002
  %1026 = vmatpush.msra.mxu0 %v1001
  %1027 = vmatpush.msra.mxu0 %v1000
  %1028 = vmatpush.msra.mxu0 %v999
  %1029 = vmatpush.msra.mxu0 %v998
  %1030 = vmatpush.msra.mxu0 %v997
  %1031 = vmatpush.msra.mxu0 %v996
  %1032 = vmatmul.f32.gmra.mxu0 %v115
  %v1033 = vpop.f32.mrf.mxu0
  %v1034 = vadd.f32 %v1014, %v1033
  %1035 = vmatmul.f32.gmra.mxu0 %v116
  %v1036 = vpop.f32.mrf.mxu0
  %v1037 = vadd.f32 %v1014, %v1036
  %1038 = vmatmul.f32.gmra.mxu0 %v117
  %v1039 = vpop.f32.mrf.mxu0
  %v1040 = vadd.f32 %v1014, %v1039
  %1041 = vmatmul.f32.gmra.mxu0 %v118
  %v1042 = vpop.f32.mrf.mxu0
  %v1043 = vadd.f32 %v1014, %v1042
  %1044 = vmatmul.f32.gmra.mxu0 %v119
  %v1045 = vpop.f32.mrf.mxu0
  %v1046 = vadd.f32 %v1014, %v1045
  %1047 = vmatmul.f32.gmra.mxu0 %v120
  %v1048 = vpop.f32.mrf.mxu0
  %v1049 = vadd.f32 %v1014, %v1048
  %1050 = vmatmul.f32.gmra.mxu0 %v121
  %v1051 = vpop.f32.mrf.mxu0
  %v1052 = vadd.f32 %v1014, %v1051
  %1053 = vmatmul.f32.gmra.mxu0 %v122
  %v1054 = vpop.f32.mrf.mxu0
  %v1055 = vadd.f32 %v1014, %v1054
  %1056 = vmatmul.f32.gmra.mxu0 %v123
  %v1057 = vpop.f32.mrf.mxu0
  %v1058 = vadd.f32 %v1014, %v1057
  %1059 = vmatmul.f32.gmra.mxu0 %v124
  %v1060 = vpop.f32.mrf.mxu0
  %v1061 = vadd.f32 %v1014, %v1060
  %1062 = vmatmul.f32.gmra.mxu0 %v125
  %v1063 = vpop.f32.mrf.mxu0
  %v1064 = vadd.f32 %v1014, %v1063
  %1065 = vmatmul.f32.gmra.mxu0 %v126
  %v1066 = vpop.f32.mrf.mxu0
  %v1067 = vadd.f32 %v1014, %v1066
  %1068 = vmatmul.f32.gmra.mxu0 %v127
  %v1069 = vpop.f32.mrf.mxu0
  %v1070 = vadd.f32 %v1014, %v1069
  %1071 = vmatmul.f32.gmra.mxu0 %v128
  %v1072 = vpop.f32.mrf.mxu0
  %v1073 = vadd.f32 %v1014, %v1072
  %1074 = vmatmul.f32.gmra.mxu0 %v129
  %v1075 = vpop.f32.mrf.mxu0
  %v1076 = vadd.f32 %v1014, %v1075
  %1077 = vmatmul.f32.gmra.mxu0 %v130
  %v1078 = vpop.f32.mrf.mxu0
  %v1079 = vadd.f32 %v1014, %v1078
  %1080 = vdwg.mxu0
  %v1081 = vmul.f32 %v294, %v1034
  %v1082 = vmul.f32 %v309, %v1037
  %v1083 = vmul.f32 %v324, %v1040
  %v1084 = vmul.f32 %v339, %v1043
  %v1085 = vmul.f32 %v354, %v1046
  %v1086 = vmul.f32 %v369, %v1049
  %v1087 = vmul.f32 %v384, %v1052
  %v1088 = vmul.f32 %v399, %v1055
  %v1089 = vmul.f32 %v414, %v1058
  %v1090 = vmul.f32 %v429, %v1061
  %v1091 = vmul.f32 %v444, %v1064
  %v1092 = vmul.f32 %v459, %v1067
  %v1093 = vmul.f32 %v474, %v1070
  %v1094 = vmul.f32 %v489, %v1073
  %v1095 = vmul.f32 %v504, %v1076
  %v1096 = vmul.f32 %v519, %v1079
  %v1097 = vadd.f32 %v949, %v1081
  %v1098 = vadd.f32 %v952, %v1082
  %v1099 = vadd.f32 %v955, %v1083
  %v1100 = vadd.f32 %v958, %v1084
  %v1101 = vadd.f32 %v961, %v1085
  %v1102 = vadd.f32 %v964, %v1086
  %v1103 = vadd.f32 %v967, %v1087
  %v1104 = vadd.f32 %v970, %v1088
  %v1105 = vadd.f32 %v973, %v1089
  %v1106 = vadd.f32 %v976, %v1090
  %v1107 = vadd.f32 %v979, %v1091
  %v1108 = vadd.f32 %v982, %v1092
  %v1109 = vadd.f32 %v985, %v1093
  %v1110 = vadd.f32 %v988, %v1094
  %v1111 = vadd.f32 %v991, %v1095
  %v1112 = vadd.f32 %v994, %v1096
  %v1113 = vtanh.pop %v1097
  %v1114 = vtanh.pop %v1098
  %v1115 = vtanh.pop %v1099
  %v1116 = vtanh.pop %v1100
  %v1117 = vtanh.pop %v1101
  %v1118 = vtanh.pop %v1102
  %v1119 = vtanh.pop %v1103
  %v1120 = vtanh.pop %v1104
  %v1121 = vtanh.pop %v1105
  %v1122 = vtanh.pop %v1106
  %v1123 = vtanh.pop %v1107
  %v1124 = vtanh.pop %v1108
  %v1125 = vtanh.pop %v1109
  %v1126 = vtanh.pop %v1110
  %v1127 = vtanh.pop %v1111
  %v1128 = vtanh.pop %v1112
  %v1129 = vsub.f32 1.0, %v685
  %v1130 = vsub.f32 1.0, %v700
  %v1131 = vsub.f32 1.0, %v715
  %v1132 = vsub.f32 1.0, %v730
  %v1133 = vsub.f32 1.0, %v745
  %v1134 = vsub.f32 1.0, %v760
  %v1135 = vsub.f32 1.0, %v775
  %v1136 = vsub.f32 1.0, %v790
  %v1137 = vsub.f32 1.0, %v805
  %v1138 = vsub.f32 1.0, %v820
  %v1139 = vsub.f32 1.0, %v835
  %v1140 = vsub.f32 1.0, %v850
  %v1141 = vsub.f32 1.0, %v865
  %v1142 = vsub.f32 1.0, %v880
  %v1143 = vsub.f32 1.0, %v895
  %v1144 = vsub.f32 1.0, %v910
  %v1145 = vmul.f32 %v1129, %v1113
  %v1146 = vmul.f32 %v1130, %v1114
  %v1147 = vmul.f32 %v1131, %v1115
  %v1148 = vmul.f32 %v1132, %v1116
  %v1149 = vmul.f32 %v1133, %v1117
  %v1150 = vmul.f32 %v1134, %v1118
  %v1151 = vmul.f32 %v1135, %v1119
  %v1152 = vmul.f32 %v1136, %v1120
  %v1153 = vmul.f32 %v1137, %v1121
  %v1154 = vmul.f32 %v1138, %v1122
  %v1155 = vmul.f32 %v1139, %v1123
  %v1156 = vmul.f32 %v1140, %v1124
  %v1157 = vmul.f32 %v1141, %v1125
  %v1158 = vmul.f32 %v1142, %v1126
  %v1159 = vmul.f32 %v1143, %v1127
  %v1160 = vmul.f32 %v1144, %v1128
  %v1161 = vmul.f32 %v685, %v115
  %v1162 = vmul.f32 %v700, %v116
  %v1163 = vmul.f32 %v715, %v117
  %v1164 = vmul.f32 %v730, %v118
  %v1165 = vmul.f32 %v745, %v119
  %v1166 = vmul.f32 %v760, %v120
  %v1167 = vmul.f32 %v775, %v121
  %v1168 = vmul.f32 %v790, %v122
  %v1169 = vmul.f32 %v805, %v123
  %v1170 = vmul.f32 %v820, %v124
  %v1171 = vmul.f32 %v835, %v125
  %v1172 = vmul.f32 %v850, %v126
  %v1173 = vmul.f32 %v865, %v127
  %v1174 = vmul.f32 %v880, %v128
  %v1175 = vmul.f32 %v895, %v129
  %v1176 = vmul.f32 %v910, %v130
  %v1177 = vadd.f32 %v1145, %v1161
  %v1178 = vadd.f32 %v1146, %v1162
  %v1179 = vadd.f32 %v1147, %v1163
  %v1180 = vadd.f32 %v1148, %v1164
  %v1181 = vadd.f32 %v1149, %v1165
  %v1182 = vadd.f32 %v1150, %v1166
  %v1183 = vadd.f32 %v1151, %v1167
  %v1184 = vadd.f32 %v1152, %v1168
  %v1185 = vadd.f32 %v1153, %v1169
  %v1186 = vadd.f32 %v1154, %v1170
  %v1187 = vadd.f32 %v1155, %v1171
  %v1188 = vadd.f32 %v1156, %v1172
  %v1189 = vadd.f32 %v1157, %v1173
  %v1190 = vadd.f32 %v1158, %v1174
  %v1191 = vadd.f32 %v1159, %v1175
  %v1192 = vadd.f32 %v1160, %v1176
  %1193 = vmatpush.msra.mxu0 %v1192
  %1194 = vmatpush.msra.mxu0 %v1191
  %1195 = vmatpush.msra.mxu0 %v1190
  %1196 = vmatpush.msra.mxu0 %v1189
  %1197 = vmatpush.msra.mxu0 %v1188
  %1198 = vmatpush.msra.mxu0 %v1187
  %1199 = vmatpush.msra.mxu0 %v1186
  %1200 = vmatpush.msra.mxu0 %v1185
  %1201 = vmatpush.msra.mxu0 %v1184
  %1202 = vmatpush.msra.mxu0 %v1183
  %1203 = vmatpush.msra.mxu0 %v1182
  %1204 = vmatpush.msra.mxu0 %v1181
  %1205 = vmatpush.msra.mxu0 %v1180
  %1206 = vmatpush.msra.mxu0 %v1179
  %1207 = vmatpush.msra.mxu0 %v1178
  %1208 = vmatpush.msra.mxu0 %v1177
  %1209 = vmatmul.f32.gmra.mxu0 %v84
  %v1210 = vpop.f32.mrf.mxu0
  %v1211 = vadd.f32 0.0, %v1210
  %1212 = vmatmul.f32.gmra.mxu0 %v87
  %v1213 = vpop.f32.mrf.mxu0
  %v1214 = vadd.f32 0.0, %v1213
  %1215 = vmatmul.f32.gmra.mxu0 %v90
  %v1216 = vpop.f32.mrf.mxu0
  %v1217 = vadd.f32 0.0, %v1216
  %1218 = vmatmul.f32.gmra.mxu0 %v93
  %v1219 = vpop.f32.mrf.mxu0
  %v1220 = vadd.f32 0.0, %v1219
  %1221 = vmatmul.f32.gmra.mxu0 %v96
  %v1222 = vpop.f32.mrf.mxu0
  %v1223 = vadd.f32 0.0, %v1222
  %1224 = vmatmul.f32.gmra.mxu0 %v99
  %v1225 = vpop.f32.mrf.mxu0
  %v1226 = vadd.f32 0.0, %v1225
  %1227 = vmatmul.f32.gmra.mxu0 %v102
  %v1228 = vpop.f32.mrf.mxu0
  %v1229 = vadd.f32 0.0, %v1228
  %1230 = vmatmul.f32.gmra.mxu0 %v105
  %v1231 = vpop.f32.mrf.mxu0
  %v1232 = vadd.f32 0.0, %v1231
  %1233 = vdwg.mxu0
  %vm1234 = vcmask 523264
  %v1236 = vsel %vm1234, %v107, 0
  %v1239 = vsel %vm1234, %v108, 0
  %v1242 = vsel %vm1234, %v109, 0
  %v1245 = vsel %vm1234, %v110, 0
  %v1248 = vsel %vm1234, %v111, 0
  %v1251 = vsel %vm1234, %v112, 0
  %v1254 = vsel %vm1234, %v113, 0
  %v1257 = vsel %vm1234, %v114, 0
  %1259 = vmatpush.msra.mxu0 0.0
  %1260 = vmatpush.msra.mxu0 0.0
  %1261 = vmatpush.msra.mxu0 0.0
  %1262 = vmatpush.msra.mxu0 0.0
  %1263 = vmatpush.msra.mxu0 0.0
  %1264 = vmatpush.msra.mxu0 0.0
  %1265 = vmatpush.msra.mxu0 0.0
  %1266 = vmatpush.msra.mxu0 0.0
  %1267 = vmatpush.msra.mxu0 %v1232
  %1268 = vmatpush.msra.mxu0 %v1229
  %1269 = vmatpush.msra.mxu0 %v1226
  %1270 = vmatpush.msra.mxu0 %v1223
  %1271 = vmatpush.msra.mxu0 %v1220
  %1272 = vmatpush.msra.mxu0 %v1217
  %1273 = vmatpush.msra.mxu0 %v1214
  %1274 = vmatpush.msra.mxu0 %v1211
  %1275 = vmatmul.f32.gmra.mxu0 %v1236
  %v1276 = vpop.f32.mrf.mxu0
  %v1277 = vadd.f32 0.0, %v1276
  %1278 = vmatmul.f32.gmra.mxu0 %v1239
  %v1279 = vpop.f32.mrf.mxu0
  %v1280 = vadd.f32 0.0, %v1279
  %1281 = vmatmul.f32.gmra.mxu0 %v1242
  %v1282 = vpop.f32.mrf.mxu0
  %v1283 = vadd.f32 0.0, %v1282
  %1284 = vmatmul.f32.gmra.mxu0 %v1245
  %v1285 = vpop.f32.mrf.mxu0
  %v1286 = vadd.f32 0.0, %v1285
  %1287 = vmatmul.f32.gmra.mxu0 %v1248
  %v1288 = vpop.f32.mrf.mxu0
  %v1289 = vadd.f32 0.0, %v1288
  %1290 = vmatmul.f32.gmra.mxu0 %v1251
  %v1291 = vpop.f32.mrf.mxu0
  %v1292 = vadd.f32 0.0, %v1291
  %1293 = vmatmul.f32.gmra.mxu0 %v1254
  %v1294 = vpop.f32.mrf.mxu0
  %v1295 = vadd.f32 0.0, %v1294
  %1296 = vmatmul.f32.gmra.mxu0 %v1257
  %v1297 = vpop.f32.mrf.mxu0
  %v1298 = vadd.f32 0.0, %v1297
  %1299 = vdwg.mxu0
  %s1300 = scalar_lea.vmem %s4, 128
  %v1301 = vld [vmem:[%s1300] sm:$0xff]
  %v1302 = vld [vmem:[%s1300 + $0x8] sm:$0xff]
  %v1303 = vld [vmem:[%s1300 + $0x10] sm:$0xff]
  %v1304 = vld [vmem:[%s1300 + $0x18] sm:$0xff]
  %v1305 = vld [vmem:[%s1300 + $0x20] sm:$0xff]
  %v1306 = vld [vmem:[%s1300 + $0x28] sm:$0xff]
  %v1307 = vld [vmem:[%s1300 + $0x30] sm:$0xff]
  %v1308 = vld [vmem:[%s1300 + $0x38] sm:$0xff]
  %v1309 = vld [vmem:[%s1300 + $0x40] sm:$0xff]
  %v1310 = vld [vmem:[%s1300 + $0x48] sm:$0xff]
  %v1311 = vld [vmem:[%s1300 + $0x50] sm:$0xff]
  %v1312 = vld [vmem:[%s1300 + $0x58] sm:$0xff]
  %v1313 = vld [vmem:[%s1300 + $0x60] sm:$0xff]
  %v1314 = vld [vmem:[%s1300 + $0x68] sm:$0xff]
  %v1315 = vld [vmem:[%s1300 + $0x70] sm:$0xff]
  %v1316 = vld [vmem:[%s1300 + $0x78] sm:$0xff]
  %s1317 = scalar_lea.vmem %s5, 256
  %v1318 = vld [vmem:[%s1317] sm:$0xff]
  %v1319 = vld [vmem:[%s1317 + $0x8] sm:$0xff]
  %v1320 = vld [vmem:[%s1317 + $0x10] sm:$0xff]
  %v1321 = vld [vmem:[%s1317 + $0x18] sm:$0xff]
  %v1322 = vld [vmem:[%s1317 + $0x20] sm:$0xff]
  %v1323 = vld [vmem:[%s1317 + $0x28] sm:$0xff]
  %v1324 = vld [vmem:[%s1317 + $0x30] sm:$0xff]
  %v1325 = vld [vmem:[%s1317 + $0x38] sm:$0xff]
  %v1326 = vld [vmem:[%s1317 + $0x40] sm:$0xff]
  %v1327 = vld [vmem:[%s1317 + $0x48] sm:$0xff]
  %v1328 = vld [vmem:[%s1317 + $0x50] sm:$0xff]
  %v1329 = vld [vmem:[%s1317 + $0x58] sm:$0xff]
  %v1330 = vld [vmem:[%s1317 + $0x60] sm:$0xff]
  %v1331 = vld [vmem:[%s1317 + $0x68] sm:$0xff]
  %v1332 = vld [vmem:[%s1317 + $0x70] sm:$0xff]
  %v1333 = vld [vmem:[%s1317 + $0x78] sm:$0xff]
  %s1334 = scalar_lea.vmem %s6, 2
  %v1335 = vld [vmem:[%s1334] sm:$0x1]
  %v1337 = vperm.slane %v1335, 0
  %1339 = vmatpush.msra.mxu0 %v1333
  %1340 = vmatpush.msra.mxu0 %v1332
  %1341 = vmatpush.msra.mxu0 %v1331
  %1342 = vmatpush.msra.mxu0 %v1330
  %1343 = vmatpush.msra.mxu0 %v1329
  %1344 = vmatpush.msra.mxu0 %v1328
  %1345 = vmatpush.msra.mxu0 %v1327
  %1346 = vmatpush.msra.mxu0 %v1326
  %1347 = vmatpush.msra.mxu0 %v1325
  %1348 = vmatpush.msra.mxu0 %v1324
  %1349 = vmatpush.msra.mxu0 %v1323
  %1350 = vmatpush.msra.mxu0 %v1322
  %1351 = vmatpush.msra.mxu0 %v1321
  %1352 = vmatpush.msra.mxu0 %v1320
  %1353 = vmatpush.msra.mxu0 %v1319
  %1354 = vmatpush.msra.mxu0 %v1318
  %1355 = vmatmul.f32.gmra.mxu0 %v1301
  %v1356 = vpop.f32.mrf.mxu0
  %v1357 = vadd.f32 %v1337, %v1356
  %1358 = vmatmul.f32.gmra.mxu0 %v1302
  %v1359 = vpop.f32.mrf.mxu0
  %v1360 = vadd.f32 %v1337, %v1359
  %1361 = vmatmul.f32.gmra.mxu0 %v1303
  %v1362 = vpop.f32.mrf.mxu0
  %v1363 = vadd.f32 %v1337, %v1362
  %1364 = vmatmul.f32.gmra.mxu0 %v1304
  %v1365 = vpop.f32.mrf.mxu0
  %v1366 = vadd.f32 %v1337, %v1365
  %1367 = vmatmul.f32.gmra.mxu0 %v1305
  %v1368 = vpop.f32.mrf.mxu0
  %v1369 = vadd.f32 %v1337, %v1368
  %1370 = vmatmul.f32.gmra.mxu0 %v1306
  %v1371 = vpop.f32.mrf.mxu0
  %v1372 = vadd.f32 %v1337, %v1371
  %1373 = vmatmul.f32.gmra.mxu0 %v1307
  %v1374 = vpop.f32.mrf.mxu0
  %v1375 = vadd.f32 %v1337, %v1374
  %1376 = vmatmul.f32.gmra.mxu0 %v1308
  %v1377 = vpop.f32.mrf.mxu0
  %v1378 = vadd.f32 %v1337, %v1377
  %1379 = vmatmul.f32.gmra.mxu0 %v1309
  %v1380 = vpop.f32.mrf.mxu0
  %v1381 = vadd.f32 %v1337, %v1380
  %1382 = vmatmul.f32.gmra.mxu0 %v1310
  %v1383 = vpop.f32.mrf.mxu0
  %v1384 = vadd.f32 %v1337, %v1383
  %1385 = vmatmul.f32.gmra.mxu0 %v1311
  %v1386 = vpop.f32.mrf.mxu0
  %v1387 = vadd.f32 %v1337, %v1386
  %1388 = vmatmul.f32.gmra.mxu0 %v1312
  %v1389 = vpop.f32.mrf.mxu0
  %v1390 = vadd.f32 %v1337, %v1389
  %1391 = vmatmul.f32.gmra.mxu0 %v1313
  %v1392 = vpop.f32.mrf.mxu0
  %v1393 = vadd.f32 %v1337, %v1392
  %1394 = vmatmul.f32.gmra.mxu0 %v1314
  %v1395 = vpop.f32.mrf.mxu0
  %v1396 = vadd.f32 %v1337, %v1395
  %1397 = vmatmul.f32.gmra.mxu0 %v1315
  %v1398 = vpop.f32.mrf.mxu0
  %v1399 = vadd.f32 %v1337, %v1398
  %1400 = vmatmul.f32.gmra.mxu0 %v1316
  %v1401 = vpop.f32.mrf.mxu0
  %v1402 = vadd.f32 %v1337, %v1401
  %1403 = vdwg.mxu0
  %v1404 = vxor.u32 %v1357, 2147483648
  %v1405 = vxor.u32 %v1360, 2147483648
  %v1406 = vxor.u32 %v1363, 2147483648
  %v1407 = vxor.u32 %v1366, 2147483648
  %v1408 = vxor.u32 %v1369, 2147483648
  %v1409 = vxor.u32 %v1372, 2147483648
  %v1410 = vxor.u32 %v1375, 2147483648
  %v1411 = vxor.u32 %v1378, 2147483648
  %v1412 = vxor.u32 %v1381, 2147483648
  %v1413 = vxor.u32 %v1384, 2147483648
  %v1414 = vxor.u32 %v1387, 2147483648
  %v1415 = vxor.u32 %v1390, 2147483648
  %v1416 = vxor.u32 %v1393, 2147483648
  %v1417 = vxor.u32 %v1396, 2147483648
  %v1418 = vxor.u32 %v1399, 2147483648
  %v1419 = vxor.u32 %v1402, 2147483648
  %v1420 = vmul.f32 %v1404, 1.442695
  %v1421 = vpow.pop %v1420
  %v1422 = vmul.f32 %v1405, 1.442695
  %v1423 = vpow.pop %v1422
  %v1424 = vmul.f32 %v1406, 1.442695
  %v1425 = vpow.pop %v1424
  %v1426 = vmul.f32 %v1407, 1.442695
  %v1427 = vpow.pop %v1426
  %v1428 = vmul.f32 %v1408, 1.442695
  %v1429 = vpow.pop %v1428
  %v1430 = vmul.f32 %v1409, 1.442695
  %v1431 = vpow.pop %v1430
  %v1432 = vmul.f32 %v1410, 1.442695
  %v1433 = vpow.pop %v1432
  %v1434 = vmul.f32 %v1411, 1.442695
  %v1435 = vpow.pop %v1434
  %v1436 = vmul.f32 %v1412, 1.442695
  %v1437 = vpow.pop %v1436
  %v1438 = vmul.f32 %v1413, 1.442695
  %v1439 = vpow.pop %v1438
  %v1440 = vmul.f32 %v1414, 1.442695
  %v1441 = vpow.pop %v1440
  %v1442 = vmul.f32 %v1415, 1.442695
  %v1443 = vpow.pop %v1442
  %v1444 = vmul.f32 %v1416, 1.442695
  %v1445 = vpow.pop %v1444
  %v1446 = vmul.f32 %v1417, 1.442695
  %v1447 = vpow.pop %v1446
  %v1448 = vmul.f32 %v1418, 1.442695
  %v1449 = vpow.pop %v1448
  %v1450 = vmul.f32 %v1419, 1.442695
  %v1451 = vpow.pop %v1450
  %v1452 = vadd.f32 %v1421, 1.0
  %v1453 = vadd.f32 %v1423, 1.0
  %v1454 = vadd.f32 %v1425, 1.0
  %v1455 = vadd.f32 %v1427, 1.0
  %v1456 = vadd.f32 %v1429, 1.0
  %v1457 = vadd.f32 %v1431, 1.0
  %v1458 = vadd.f32 %v1433, 1.0
  %v1459 = vadd.f32 %v1435, 1.0
  %v1460 = vadd.f32 %v1437, 1.0
  %v1461 = vadd.f32 %v1439, 1.0
  %v1462 = vadd.f32 %v1441, 1.0
  %v1463 = vadd.f32 %v1443, 1.0
  %v1464 = vadd.f32 %v1445, 1.0
  %v1465 = vadd.f32 %v1447, 1.0
  %v1466 = vadd.f32 %v1449, 1.0
  %v1467 = vadd.f32 %v1451, 1.0
  %v1468 = vrcp.pop %v1452
  %v1469 = vmul.f32 %v1452, %v1468
  %v1470 = vsub.f32 1.0, %v1469
  %v1471 = vmul.f32 %v1468, %v1470
  %v1472 = vadd.f32 %v1468, %v1471
  %vm1473 = vweird.f32 %v1452
  %vm1474 = vweird.f32 %v1468
  %vm1475 = vmor %vm1473, %vm1474
  %v1476 = vsel %vm1475, %v1468, %v1472
  %v1477 = vand.u32 2147483647, %v1452
  %vm1478 = vcmp.eq.f32.partialorder %v1477, 8.507059e+37
  %v1479 = vand.u32 %v1452, 2147483648
  %v1480 = vor.u32 1.1754944e-38, %v1479
  %v1481 = vsel %vm1478, %v1480, %v1476
  %v1482 = vmul.f32 1.0, %v1481
  %v1483 = vrcp.pop %v1453
  %v1484 = vmul.f32 %v1453, %v1483
  %v1485 = vsub.f32 1.0, %v1484
  %v1486 = vmul.f32 %v1483, %v1485
  %v1487 = vadd.f32 %v1483, %v1486
  %vm1488 = vweird.f32 %v1453
  %vm1489 = vweird.f32 %v1483
  %vm1490 = vmor %vm1488, %vm1489
  %v1491 = vsel %vm1490, %v1483, %v1487
  %v1492 = vand.u32 2147483647, %v1453
  %vm1493 = vcmp.eq.f32.partialorder %v1492, 8.507059e+37
  %v1494 = vand.u32 %v1453, 2147483648
  %v1495 = vor.u32 1.1754944e-38, %v1494
  %v1496 = vsel %vm1493, %v1495, %v1491
  %v1497 = vmul.f32 1.0, %v1496
  %v1498 = vrcp.pop %v1454
  %v1499 = vmul.f32 %v1454, %v1498
  %v1500 = vsub.f32 1.0, %v1499
  %v1501 = vmul.f32 %v1498, %v1500
  %v1502 = vadd.f32 %v1498, %v1501
  %vm1503 = vweird.f32 %v1454
  %vm1504 = vweird.f32 %v1498
  %vm1505 = vmor %vm1503, %vm1504
  %v1506 = vsel %vm1505, %v1498, %v1502
  %v1507 = vand.u32 2147483647, %v1454
  %vm1508 = vcmp.eq.f32.partialorder %v1507, 8.507059e+37
  %v1509 = vand.u32 %v1454, 2147483648
  %v1510 = vor.u32 1.1754944e-38, %v1509
  %v1511 = vsel %vm1508, %v1510, %v1506
  %v1512 = vmul.f32 1.0, %v1511
  %v1513 = vrcp.pop %v1455
  %v1514 = vmul.f32 %v1455, %v1513
  %v1515 = vsub.f32 1.0, %v1514
  %v1516 = vmul.f32 %v1513, %v1515
  %v1517 = vadd.f32 %v1513, %v1516
  %vm1518 = vweird.f32 %v1455
  %vm1519 = vweird.f32 %v1513
  %vm1520 = vmor %vm1518, %vm1519
  %v1521 = vsel %vm1520, %v1513, %v1517
  %v1522 = vand.u32 2147483647, %v1455
  %vm1523 = vcmp.eq.f32.partialorder %v1522, 8.507059e+37
  %v1524 = vand.u32 %v1455, 2147483648
  %v1525 = vor.u32 1.1754944e-38, %v1524
  %v1526 = vsel %vm1523, %v1525, %v1521
  %v1527 = vmul.f32 1.0, %v1526
  %v1528 = vrcp.pop %v1456
  %v1529 = vmul.f32 %v1456, %v1528
  %v1530 = vsub.f32 1.0, %v1529
  %v1531 = vmul.f32 %v1528, %v1530
  %v1532 = vadd.f32 %v1528, %v1531
  %vm1533 = vweird.f32 %v1456
  %vm1534 = vweird.f32 %v1528
  %vm1535 = vmor %vm1533, %vm1534
  %v1536 = vsel %vm1535, %v1528, %v1532
  %v1537 = vand.u32 2147483647, %v1456
  %vm1538 = vcmp.eq.f32.partialorder %v1537, 8.507059e+37
  %v1539 = vand.u32 %v1456, 2147483648
  %v1540 = vor.u32 1.1754944e-38, %v1539
  %v1541 = vsel %vm1538, %v1540, %v1536
  %v1542 = vmul.f32 1.0, %v1541
  %v1543 = vrcp.pop %v1457
  %v1544 = vmul.f32 %v1457, %v1543
  %v1545 = vsub.f32 1.0, %v1544
  %v1546 = vmul.f32 %v1543, %v1545
  %v1547 = vadd.f32 %v1543, %v1546
  %vm1548 = vweird.f32 %v1457
  %vm1549 = vweird.f32 %v1543
  %vm1550 = vmor %vm1548, %vm1549
  %v1551 = vsel %vm1550, %v1543, %v1547
  %v1552 = vand.u32 2147483647, %v1457
  %vm1553 = vcmp.eq.f32.partialorder %v1552, 8.507059e+37
  %v1554 = vand.u32 %v1457, 2147483648
  %v1555 = vor.u32 1.1754944e-38, %v1554
  %v1556 = vsel %vm1553, %v1555, %v1551
  %v1557 = vmul.f32 1.0, %v1556
  %v1558 = vrcp.pop %v1458
  %v1559 = vmul.f32 %v1458, %v1558
  %v1560 = vsub.f32 1.0, %v1559
  %v1561 = vmul.f32 %v1558, %v1560
  %v1562 = vadd.f32 %v1558, %v1561
  %vm1563 = vweird.f32 %v1458
  %vm1564 = vweird.f32 %v1558
  %vm1565 = vmor %vm1563, %vm1564
  %v1566 = vsel %vm1565, %v1558, %v1562
  %v1567 = vand.u32 2147483647, %v1458
  %vm1568 = vcmp.eq.f32.partialorder %v1567, 8.507059e+37
  %v1569 = vand.u32 %v1458, 2147483648
  %v1570 = vor.u32 1.1754944e-38, %v1569
  %v1571 = vsel %vm1568, %v1570, %v1566
  %v1572 = vmul.f32 1.0, %v1571
  %v1573 = vrcp.pop %v1459
  %v1574 = vmul.f32 %v1459, %v1573
  %v1575 = vsub.f32 1.0, %v1574
  %v1576 = vmul.f32 %v1573, %v1575
  %v1577 = vadd.f32 %v1573, %v1576
  %vm1578 = vweird.f32 %v1459
  %vm1579 = vweird.f32 %v1573
  %vm1580 = vmor %vm1578, %vm1579
  %v1581 = vsel %vm1580, %v1573, %v1577
  %v1582 = vand.u32 2147483647, %v1459
  %vm1583 = vcmp.eq.f32.partialorder %v1582, 8.507059e+37
  %v1584 = vand.u32 %v1459, 2147483648
  %v1585 = vor.u32 1.1754944e-38, %v1584
  %v1586 = vsel %vm1583, %v1585, %v1581
  %v1587 = vmul.f32 1.0, %v1586
  %v1588 = vrcp.pop %v1460
  %v1589 = vmul.f32 %v1460, %v1588
  %v1590 = vsub.f32 1.0, %v1589
  %v1591 = vmul.f32 %v1588, %v1590
  %v1592 = vadd.f32 %v1588, %v1591
  %vm1593 = vweird.f32 %v1460
  %vm1594 = vweird.f32 %v1588
  %vm1595 = vmor %vm1593, %vm1594
  %v1596 = vsel %vm1595, %v1588, %v1592
  %v1597 = vand.u32 2147483647, %v1460
  %vm1598 = vcmp.eq.f32.partialorder %v1597, 8.507059e+37
  %v1599 = vand.u32 %v1460, 2147483648
  %v1600 = vor.u32 1.1754944e-38, %v1599
  %v1601 = vsel %vm1598, %v1600, %v1596
  %v1602 = vmul.f32 1.0, %v1601
  %v1603 = vrcp.pop %v1461
  %v1604 = vmul.f32 %v1461, %v1603
  %v1605 = vsub.f32 1.0, %v1604
  %v1606 = vmul.f32 %v1603, %v1605
  %v1607 = vadd.f32 %v1603, %v1606
  %vm1608 = vweird.f32 %v1461
  %vm1609 = vweird.f32 %v1603
  %vm1610 = vmor %vm1608, %vm1609
  %v1611 = vsel %vm1610, %v1603, %v1607
  %v1612 = vand.u32 2147483647, %v1461
  %vm1613 = vcmp.eq.f32.partialorder %v1612, 8.507059e+37
  %v1614 = vand.u32 %v1461, 2147483648
  %v1615 = vor.u32 1.1754944e-38, %v1614
  %v1616 = vsel %vm1613, %v1615, %v1611
  %v1617 = vmul.f32 1.0, %v1616
  %v1618 = vrcp.pop %v1462
  %v1619 = vmul.f32 %v1462, %v1618
  %v1620 = vsub.f32 1.0, %v1619
  %v1621 = vmul.f32 %v1618, %v1620
  %v1622 = vadd.f32 %v1618, %v1621
  %vm1623 = vweird.f32 %v1462
  %vm1624 = vweird.f32 %v1618
  %vm1625 = vmor %vm1623, %vm1624
  %v1626 = vsel %vm1625, %v1618, %v1622
  %v1627 = vand.u32 2147483647, %v1462
  %vm1628 = vcmp.eq.f32.partialorder %v1627, 8.507059e+37
  %v1629 = vand.u32 %v1462, 2147483648
  %v1630 = vor.u32 1.1754944e-38, %v1629
  %v1631 = vsel %vm1628, %v1630, %v1626
  %v1632 = vmul.f32 1.0, %v1631
  %v1633 = vrcp.pop %v1463
  %v1634 = vmul.f32 %v1463, %v1633
  %v1635 = vsub.f32 1.0, %v1634
  %v1636 = vmul.f32 %v1633, %v1635
  %v1637 = vadd.f32 %v1633, %v1636
  %vm1638 = vweird.f32 %v1463
  %vm1639 = vweird.f32 %v1633
  %vm1640 = vmor %vm1638, %vm1639
  %v1641 = vsel %vm1640, %v1633, %v1637
  %v1642 = vand.u32 2147483647, %v1463
  %vm1643 = vcmp.eq.f32.partialorder %v1642, 8.507059e+37
  %v1644 = vand.u32 %v1463, 2147483648
  %v1645 = vor.u32 1.1754944e-38, %v1644
  %v1646 = vsel %vm1643, %v1645, %v1641
  %v1647 = vmul.f32 1.0, %v1646
  %v1648 = vrcp.pop %v1464
  %v1649 = vmul.f32 %v1464, %v1648
  %v1650 = vsub.f32 1.0, %v1649
  %v1651 = vmul.f32 %v1648, %v1650
  %v1652 = vadd.f32 %v1648, %v1651
  %vm1653 = vweird.f32 %v1464
  %vm1654 = vweird.f32 %v1648
  %vm1655 = vmor %vm1653, %vm1654
  %v1656 = vsel %vm1655, %v1648, %v1652
  %v1657 = vand.u32 2147483647, %v1464
  %vm1658 = vcmp.eq.f32.partialorder %v1657, 8.507059e+37
  %v1659 = vand.u32 %v1464, 2147483648
  %v1660 = vor.u32 1.1754944e-38, %v1659
  %v1661 = vsel %vm1658, %v1660, %v1656
  %v1662 = vmul.f32 1.0, %v1661
  %v1663 = vrcp.pop %v1465
  %v1664 = vmul.f32 %v1465, %v1663
  %v1665 = vsub.f32 1.0, %v1664
  %v1666 = vmul.f32 %v1663, %v1665
  %v1667 = vadd.f32 %v1663, %v1666
  %vm1668 = vweird.f32 %v1465
  %vm1669 = vweird.f32 %v1663
  %vm1670 = vmor %vm1668, %vm1669
  %v1671 = vsel %vm1670, %v1663, %v1667
  %v1672 = vand.u32 2147483647, %v1465
  %vm1673 = vcmp.eq.f32.partialorder %v1672, 8.507059e+37
  %v1674 = vand.u32 %v1465, 2147483648
  %v1675 = vor.u32 1.1754944e-38, %v1674
  %v1676 = vsel %vm1673, %v1675, %v1671
  %v1677 = vmul.f32 1.0, %v1676
  %v1678 = vrcp.pop %v1466
  %v1679 = vmul.f32 %v1466, %v1678
  %v1680 = vsub.f32 1.0, %v1679
  %v1681 = vmul.f32 %v1678, %v1680
  %v1682 = vadd.f32 %v1678, %v1681
  %vm1683 = vweird.f32 %v1466
  %vm1684 = vweird.f32 %v1678
  %vm1685 = vmor %vm1683, %vm1684
  %v1686 = vsel %vm1685, %v1678, %v1682
  %v1687 = vand.u32 2147483647, %v1466
  %vm1688 = vcmp.eq.f32.partialorder %v1687, 8.507059e+37
  %v1689 = vand.u32 %v1466, 2147483648
  %v1690 = vor.u32 1.1754944e-38, %v1689
  %v1691 = vsel %vm1688, %v1690, %v1686
  %v1692 = vmul.f32 1.0, %v1691
  %v1693 = vrcp.pop %v1467
  %v1694 = vmul.f32 %v1467, %v1693
  %v1695 = vsub.f32 1.0, %v1694
  %v1696 = vmul.f32 %v1693, %v1695
  %v1697 = vadd.f32 %v1693, %v1696
  %vm1698 = vweird.f32 %v1467
  %vm1699 = vweird.f32 %v1693
  %vm1700 = vmor %vm1698, %vm1699
  %v1701 = vsel %vm1700, %v1693, %v1697
  %v1702 = vand.u32 2147483647, %v1467
  %vm1703 = vcmp.eq.f32.partialorder %v1702, 8.507059e+37
  %v1704 = vand.u32 %v1467, 2147483648
  %v1705 = vor.u32 1.1754944e-38, %v1704
  %v1706 = vsel %vm1703, %v1705, %v1701
  %v1707 = vmul.f32 1.0, %v1706
  %s1708 = scalar_lea.vmem %s5, 384
  %v1709 = vld [vmem:[%s1708] sm:$0xff]
  %v1710 = vld [vmem:[%s1708 + $0x8] sm:$0xff]
  %v1711 = vld [vmem:[%s1708 + $0x10] sm:$0xff]
  %v1712 = vld [vmem:[%s1708 + $0x18] sm:$0xff]
  %v1713 = vld [vmem:[%s1708 + $0x20] sm:$0xff]
  %v1714 = vld [vmem:[%s1708 + $0x28] sm:$0xff]
  %v1715 = vld [vmem:[%s1708 + $0x30] sm:$0xff]
  %v1716 = vld [vmem:[%s1708 + $0x38] sm:$0xff]
  %v1717 = vld [vmem:[%s1708 + $0x40] sm:$0xff]
  %v1718 = vld [vmem:[%s1708 + $0x48] sm:$0xff]
  %v1719 = vld [vmem:[%s1708 + $0x50] sm:$0xff]
  %v1720 = vld [vmem:[%s1708 + $0x58] sm:$0xff]
  %v1721 = vld [vmem:[%s1708 + $0x60] sm:$0xff]
  %v1722 = vld [vmem:[%s1708 + $0x68] sm:$0xff]
  %v1723 = vld [vmem:[%s1708 + $0x70] sm:$0xff]
  %v1724 = vld [vmem:[%s1708 + $0x78] sm:$0xff]
  %s1725 = scalar_lea.vmem %s6, 3
  %v1726 = vld [vmem:[%s1725] sm:$0x1]
  %v1728 = vperm.slane %v1726, 0
  %1730 = vmatpush.msra.mxu0 %v1724
  %1731 = vmatpush.msra.mxu0 %v1723
  %1732 = vmatpush.msra.mxu0 %v1722
  %1733 = vmatpush.msra.mxu0 %v1721
  %1734 = vmatpush.msra.mxu0 %v1720
  %1735 = vmatpush.msra.mxu0 %v1719
  %1736 = vmatpush.msra.mxu0 %v1718
  %1737 = vmatpush.msra.mxu0 %v1717
  %1738 = vmatpush.msra.mxu0 %v1716
  %1739 = vmatpush.msra.mxu0 %v1715
  %1740 = vmatpush.msra.mxu0 %v1714
  %1741 = vmatpush.msra.mxu0 %v1713
  %1742 = vmatpush.msra.mxu0 %v1712
  %1743 = vmatpush.msra.mxu0 %v1711
  %1744 = vmatpush.msra.mxu0 %v1710
  %1745 = vmatpush.msra.mxu0 %v1709
  %1746 = vmatmul.f32.gmra.mxu0 %v1301
  %v1747 = vpop.f32.mrf.mxu0
  %v1748 = vadd.f32 %v1728, %v1747
  %1749 = vmatmul.f32.gmra.mxu0 %v1302
  %v1750 = vpop.f32.mrf.mxu0
  %v1751 = vadd.f32 %v1728, %v1750
  %1752 = vmatmul.f32.gmra.mxu0 %v1303
  %v1753 = vpop.f32.mrf.mxu0
  %v1754 = vadd.f32 %v1728, %v1753
  %1755 = vmatmul.f32.gmra.mxu0 %v1304
  %v1756 = vpop.f32.mrf.mxu0
  %v1757 = vadd.f32 %v1728, %v1756
  %1758 = vmatmul.f32.gmra.mxu0 %v1305
  %v1759 = vpop.f32.mrf.mxu0
  %v1760 = vadd.f32 %v1728, %v1759
  %1761 = vmatmul.f32.gmra.mxu0 %v1306
  %v1762 = vpop.f32.mrf.mxu0
  %v1763 = vadd.f32 %v1728, %v1762
  %1764 = vmatmul.f32.gmra.mxu0 %v1307
  %v1765 = vpop.f32.mrf.mxu0
  %v1766 = vadd.f32 %v1728, %v1765
  %1767 = vmatmul.f32.gmra.mxu0 %v1308
  %v1768 = vpop.f32.mrf.mxu0
  %v1769 = vadd.f32 %v1728, %v1768
  %1770 = vmatmul.f32.gmra.mxu0 %v1309
  %v1771 = vpop.f32.mrf.mxu0
  %v1772 = vadd.f32 %v1728, %v1771
  %1773 = vmatmul.f32.gmra.mxu0 %v1310
  %v1774 = vpop.f32.mrf.mxu0
  %v1775 = vadd.f32 %v1728, %v1774
  %1776 = vmatmul.f32.gmra.mxu0 %v1311
  %v1777 = vpop.f32.mrf.mxu0
  %v1778 = vadd.f32 %v1728, %v1777
  %1779 = vmatmul.f32.gmra.mxu0 %v1312
  %v1780 = vpop.f32.mrf.mxu0
  %v1781 = vadd.f32 %v1728, %v1780
  %1782 = vmatmul.f32.gmra.mxu0 %v1313
  %v1783 = vpop.f32.mrf.mxu0
  %v1784 = vadd.f32 %v1728, %v1783
  %1785 = vmatmul.f32.gmra.mxu0 %v1314
  %v1786 = vpop.f32.mrf.mxu0
  %v1787 = vadd.f32 %v1728, %v1786
  %1788 = vmatmul.f32.gmra.mxu0 %v1315
  %v1789 = vpop.f32.mrf.mxu0
  %v1790 = vadd.f32 %v1728, %v1789
  %1791 = vmatmul.f32.gmra.mxu0 %v1316
  %v1792 = vpop.f32.mrf.mxu0
  %v1793 = vadd.f32 %v1728, %v1792
  %1794 = vdwg.mxu0
  %v1795 = vxor.u32 %v1748, 2147483648
  %v1796 = vxor.u32 %v1751, 2147483648
  %v1797 = vxor.u32 %v1754, 2147483648
  %v1798 = vxor.u32 %v1757, 2147483648
  %v1799 = vxor.u32 %v1760, 2147483648
  %v1800 = vxor.u32 %v1763, 2147483648
  %v1801 = vxor.u32 %v1766, 2147483648
  %v1802 = vxor.u32 %v1769, 2147483648
  %v1803 = vxor.u32 %v1772, 2147483648
  %v1804 = vxor.u32 %v1775, 2147483648
  %v1805 = vxor.u32 %v1778, 2147483648
  %v1806 = vxor.u32 %v1781, 2147483648
  %v1807 = vxor.u32 %v1784, 2147483648
  %v1808 = vxor.u32 %v1787, 2147483648
  %v1809 = vxor.u32 %v1790, 2147483648
  %v1810 = vxor.u32 %v1793, 2147483648
  %v1811 = vmul.f32 %v1795, 1.442695
  %v1812 = vpow.pop %v1811
  %v1813 = vmul.f32 %v1796, 1.442695
  %v1814 = vpow.pop %v1813
  %v1815 = vmul.f32 %v1797, 1.442695
  %v1816 = vpow.pop %v1815
  %v1817 = vmul.f32 %v1798, 1.442695
  %v1818 = vpow.pop %v1817
  %v1819 = vmul.f32 %v1799, 1.442695
  %v1820 = vpow.pop %v1819
  %v1821 = vmul.f32 %v1800, 1.442695
  %v1822 = vpow.pop %v1821
  %v1823 = vmul.f32 %v1801, 1.442695
  %v1824 = vpow.pop %v1823
  %v1825 = vmul.f32 %v1802, 1.442695
  %v1826 = vpow.pop %v1825
  %v1827 = vmul.f32 %v1803, 1.442695
  %v1828 = vpow.pop %v1827
  %v1829 = vmul.f32 %v1804, 1.442695
  %v1830 = vpow.pop %v1829
  %v1831 = vmul.f32 %v1805, 1.442695
  %v1832 = vpow.pop %v1831
  %v1833 = vmul.f32 %v1806, 1.442695
  %v1834 = vpow.pop %v1833
  %v1835 = vmul.f32 %v1807, 1.442695
  %v1836 = vpow.pop %v1835
  %v1837 = vmul.f32 %v1808, 1.442695
  %v1838 = vpow.pop %v1837
  %v1839 = vmul.f32 %v1809, 1.442695
  %v1840 = vpow.pop %v1839
  %v1841 = vmul.f32 %v1810, 1.442695
  %v1842 = vpow.pop %v1841
  %v1843 = vadd.f32 %v1812, 1.0
  %v1844 = vadd.f32 %v1814, 1.0
  %v1845 = vadd.f32 %v1816, 1.0
  %v1846 = vadd.f32 %v1818, 1.0
  %v1847 = vadd.f32 %v1820, 1.0
  %v1848 = vadd.f32 %v1822, 1.0
  %v1849 = vadd.f32 %v1824, 1.0
  %v1850 = vadd.f32 %v1826, 1.0
  %v1851 = vadd.f32 %v1828, 1.0
  %v1852 = vadd.f32 %v1830, 1.0
  %v1853 = vadd.f32 %v1832, 1.0
  %v1854 = vadd.f32 %v1834, 1.0
  %v1855 = vadd.f32 %v1836, 1.0
  %v1856 = vadd.f32 %v1838, 1.0
  %v1857 = vadd.f32 %v1840, 1.0
  %v1858 = vadd.f32 %v1842, 1.0
  %v1859 = vrcp.pop %v1843
  %v1860 = vmul.f32 %v1843, %v1859
  %v1861 = vsub.f32 1.0, %v1860
  %v1862 = vmul.f32 %v1859, %v1861
  %v1863 = vadd.f32 %v1859, %v1862
  %vm1864 = vweird.f32 %v1843
  %vm1865 = vweird.f32 %v1859
  %vm1866 = vmor %vm1864, %vm1865
  %v1867 = vsel %vm1866, %v1859, %v1863
  %v1868 = vand.u32 2147483647, %v1843
  %vm1869 = vcmp.eq.f32.partialorder %v1868, 8.507059e+37
  %v1870 = vand.u32 %v1843, 2147483648
  %v1871 = vor.u32 1.1754944e-38, %v1870
  %v1872 = vsel %vm1869, %v1871, %v1867
  %v1873 = vmul.f32 1.0, %v1872
  %v1874 = vrcp.pop %v1844
  %v1875 = vmul.f32 %v1844, %v1874
  %v1876 = vsub.f32 1.0, %v1875
  %v1877 = vmul.f32 %v1874, %v1876
  %v1878 = vadd.f32 %v1874, %v1877
  %vm1879 = vweird.f32 %v1844
  %vm1880 = vweird.f32 %v1874
  %vm1881 = vmor %vm1879, %vm1880
  %v1882 = vsel %vm1881, %v1874, %v1878
  %v1883 = vand.u32 2147483647, %v1844
  %vm1884 = vcmp.eq.f32.partialorder %v1883, 8.507059e+37
  %v1885 = vand.u32 %v1844, 2147483648
  %v1886 = vor.u32 1.1754944e-38, %v1885
  %v1887 = vsel %vm1884, %v1886, %v1882
  %v1888 = vmul.f32 1.0, %v1887
  %v1889 = vrcp.pop %v1845
  %v1890 = vmul.f32 %v1845, %v1889
  %v1891 = vsub.f32 1.0, %v1890
  %v1892 = vmul.f32 %v1889, %v1891
  %v1893 = vadd.f32 %v1889, %v1892
  %vm1894 = vweird.f32 %v1845
  %vm1895 = vweird.f32 %v1889
  %vm1896 = vmor %vm1894, %vm1895
  %v1897 = vsel %vm1896, %v1889, %v1893
  %v1898 = vand.u32 2147483647, %v1845
  %vm1899 = vcmp.eq.f32.partialorder %v1898, 8.507059e+37
  %v1900 = vand.u32 %v1845, 2147483648
  %v1901 = vor.u32 1.1754944e-38, %v1900
  %v1902 = vsel %vm1899, %v1901, %v1897
  %v1903 = vmul.f32 1.0, %v1902
  %v1904 = vrcp.pop %v1846
  %v1905 = vmul.f32 %v1846, %v1904
  %v1906 = vsub.f32 1.0, %v1905
  %v1907 = vmul.f32 %v1904, %v1906
  %v1908 = vadd.f32 %v1904, %v1907
  %vm1909 = vweird.f32 %v1846
  %vm1910 = vweird.f32 %v1904
  %vm1911 = vmor %vm1909, %vm1910
  %v1912 = vsel %vm1911, %v1904, %v1908
  %v1913 = vand.u32 2147483647, %v1846
  %vm1914 = vcmp.eq.f32.partialorder %v1913, 8.507059e+37
  %v1915 = vand.u32 %v1846, 2147483648
  %v1916 = vor.u32 1.1754944e-38, %v1915
  %v1917 = vsel %vm1914, %v1916, %v1912
  %v1918 = vmul.f32 1.0, %v1917
  %v1919 = vrcp.pop %v1847
  %v1920 = vmul.f32 %v1847, %v1919
  %v1921 = vsub.f32 1.0, %v1920
  %v1922 = vmul.f32 %v1919, %v1921
  %v1923 = vadd.f32 %v1919, %v1922
  %vm1924 = vweird.f32 %v1847
  %vm1925 = vweird.f32 %v1919
  %vm1926 = vmor %vm1924, %vm1925
  %v1927 = vsel %vm1926, %v1919, %v1923
  %v1928 = vand.u32 2147483647, %v1847
  %vm1929 = vcmp.eq.f32.partialorder %v1928, 8.507059e+37
  %v1930 = vand.u32 %v1847, 2147483648
  %v1931 = vor.u32 1.1754944e-38, %v1930
  %v1932 = vsel %vm1929, %v1931, %v1927
  %v1933 = vmul.f32 1.0, %v1932
  %v1934 = vrcp.pop %v1848
  %v1935 = vmul.f32 %v1848, %v1934
  %v1936 = vsub.f32 1.0, %v1935
  %v1937 = vmul.f32 %v1934, %v1936
  %v1938 = vadd.f32 %v1934, %v1937
  %vm1939 = vweird.f32 %v1848
  %vm1940 = vweird.f32 %v1934
  %vm1941 = vmor %vm1939, %vm1940
  %v1942 = vsel %vm1941, %v1934, %v1938
  %v1943 = vand.u32 2147483647, %v1848
  %vm1944 = vcmp.eq.f32.partialorder %v1943, 8.507059e+37
  %v1945 = vand.u32 %v1848, 2147483648
  %v1946 = vor.u32 1.1754944e-38, %v1945
  %v1947 = vsel %vm1944, %v1946, %v1942
  %v1948 = vmul.f32 1.0, %v1947
  %v1949 = vrcp.pop %v1849
  %v1950 = vmul.f32 %v1849, %v1949
  %v1951 = vsub.f32 1.0, %v1950
  %v1952 = vmul.f32 %v1949, %v1951
  %v1953 = vadd.f32 %v1949, %v1952
  %vm1954 = vweird.f32 %v1849
  %vm1955 = vweird.f32 %v1949
  %vm1956 = vmor %vm1954, %vm1955
  %v1957 = vsel %vm1956, %v1949, %v1953
  %v1958 = vand.u32 2147483647, %v1849
  %vm1959 = vcmp.eq.f32.partialorder %v1958, 8.507059e+37
  %v1960 = vand.u32 %v1849, 2147483648
  %v1961 = vor.u32 1.1754944e-38, %v1960
  %v1962 = vsel %vm1959, %v1961, %v1957
  %v1963 = vmul.f32 1.0, %v1962
  %v1964 = vrcp.pop %v1850
  %v1965 = vmul.f32 %v1850, %v1964
  %v1966 = vsub.f32 1.0, %v1965
  %v1967 = vmul.f32 %v1964, %v1966
  %v1968 = vadd.f32 %v1964, %v1967
  %vm1969 = vweird.f32 %v1850
  %vm1970 = vweird.f32 %v1964
  %vm1971 = vmor %vm1969, %vm1970
  %v1972 = vsel %vm1971, %v1964, %v1968
  %v1973 = vand.u32 2147483647, %v1850
  %vm1974 = vcmp.eq.f32.partialorder %v1973, 8.507059e+37
  %v1975 = vand.u32 %v1850, 2147483648
  %v1976 = vor.u32 1.1754944e-38, %v1975
  %v1977 = vsel %vm1974, %v1976, %v1972
  %v1978 = vmul.f32 1.0, %v1977
  %v1979 = vrcp.pop %v1851
  %v1980 = vmul.f32 %v1851, %v1979
  %v1981 = vsub.f32 1.0, %v1980
  %v1982 = vmul.f32 %v1979, %v1981
  %v1983 = vadd.f32 %v1979, %v1982
  %vm1984 = vweird.f32 %v1851
  %vm1985 = vweird.f32 %v1979
  %vm1986 = vmor %vm1984, %vm1985
  %v1987 = vsel %vm1986, %v1979, %v1983
  %v1988 = vand.u32 2147483647, %v1851
  %vm1989 = vcmp.eq.f32.partialorder %v1988, 8.507059e+37
  %v1990 = vand.u32 %v1851, 2147483648
  %v1991 = vor.u32 1.1754944e-38, %v1990
  %v1992 = vsel %vm1989, %v1991, %v1987
  %v1993 = vmul.f32 1.0, %v1992
  %v1994 = vrcp.pop %v1852
  %v1995 = vmul.f32 %v1852, %v1994
  %v1996 = vsub.f32 1.0, %v1995
  %v1997 = vmul.f32 %v1994, %v1996
  %v1998 = vadd.f32 %v1994, %v1997
  %vm1999 = vweird.f32 %v1852
  %vm2000 = vweird.f32 %v1994
  %vm2001 = vmor %vm1999, %vm2000
  %v2002 = vsel %vm2001, %v1994, %v1998
  %v2003 = vand.u32 2147483647, %v1852
  %vm2004 = vcmp.eq.f32.partialorder %v2003, 8.507059e+37
  %v2005 = vand.u32 %v1852, 2147483648
  %v2006 = vor.u32 1.1754944e-38, %v2005
  %v2007 = vsel %vm2004, %v2006, %v2002
  %v2008 = vmul.f32 1.0, %v2007
  %v2009 = vrcp.pop %v1853
  %v2010 = vmul.f32 %v1853, %v2009
  %v2011 = vsub.f32 1.0, %v2010
  %v2012 = vmul.f32 %v2009, %v2011
  %v2013 = vadd.f32 %v2009, %v2012
  %vm2014 = vweird.f32 %v1853
  %vm2015 = vweird.f32 %v2009
  %vm2016 = vmor %vm2014, %vm2015
  %v2017 = vsel %vm2016, %v2009, %v2013
  %v2018 = vand.u32 2147483647, %v1853
  %vm2019 = vcmp.eq.f32.partialorder %v2018, 8.507059e+37
  %v2020 = vand.u32 %v1853, 2147483648
  %v2021 = vor.u32 1.1754944e-38, %v2020
  %v2022 = vsel %vm2019, %v2021, %v2017
  %v2023 = vmul.f32 1.0, %v2022
  %v2024 = vrcp.pop %v1854
  %v2025 = vmul.f32 %v1854, %v2024
  %v2026 = vsub.f32 1.0, %v2025
  %v2027 = vmul.f32 %v2024, %v2026
  %v2028 = vadd.f32 %v2024, %v2027
  %vm2029 = vweird.f32 %v1854
  %vm2030 = vweird.f32 %v2024
  %vm2031 = vmor %vm2029, %vm2030
  %v2032 = vsel %vm2031, %v2024, %v2028
  %v2033 = vand.u32 2147483647, %v1854
  %vm2034 = vcmp.eq.f32.partialorder %v2033, 8.507059e+37
  %v2035 = vand.u32 %v1854, 2147483648
  %v2036 = vor.u32 1.1754944e-38, %v2035
  %v2037 = vsel %vm2034, %v2036, %v2032
  %v2038 = vmul.f32 1.0, %v2037
  %v2039 = vrcp.pop %v1855
  %v2040 = vmul.f32 %v1855, %v2039
  %v2041 = vsub.f32 1.0, %v2040
  %v2042 = vmul.f32 %v2039, %v2041
  %v2043 = vadd.f32 %v2039, %v2042
  %vm2044 = vweird.f32 %v1855
  %vm2045 = vweird.f32 %v2039
  %vm2046 = vmor %vm2044, %vm2045
  %v2047 = vsel %vm2046, %v2039, %v2043
  %v2048 = vand.u32 2147483647, %v1855
  %vm2049 = vcmp.eq.f32.partialorder %v2048, 8.507059e+37
  %v2050 = vand.u32 %v1855, 2147483648
  %v2051 = vor.u32 1.1754944e-38, %v2050
  %v2052 = vsel %vm2049, %v2051, %v2047
  %v2053 = vmul.f32 1.0, %v2052
  %v2054 = vrcp.pop %v1856
  %v2055 = vmul.f32 %v1856, %v2054
  %v2056 = vsub.f32 1.0, %v2055
  %v2057 = vmul.f32 %v2054, %v2056
  %v2058 = vadd.f32 %v2054, %v2057
  %vm2059 = vweird.f32 %v1856
  %vm2060 = vweird.f32 %v2054
  %vm2061 = vmor %vm2059, %vm2060
  %v2062 = vsel %vm2061, %v2054, %v2058
  %v2063 = vand.u32 2147483647, %v1856
  %vm2064 = vcmp.eq.f32.partialorder %v2063, 8.507059e+37
  %v2065 = vand.u32 %v1856, 2147483648
  %v2066 = vor.u32 1.1754944e-38, %v2065
  %v2067 = vsel %vm2064, %v2066, %v2062
  %v2068 = vmul.f32 1.0, %v2067
  %v2069 = vrcp.pop %v1857
  %v2070 = vmul.f32 %v1857, %v2069
  %v2071 = vsub.f32 1.0, %v2070
  %v2072 = vmul.f32 %v2069, %v2071
  %v2073 = vadd.f32 %v2069, %v2072
  %vm2074 = vweird.f32 %v1857
  %vm2075 = vweird.f32 %v2069
  %vm2076 = vmor %vm2074, %vm2075
  %v2077 = vsel %vm2076, %v2069, %v2073
  %v2078 = vand.u32 2147483647, %v1857
  %vm2079 = vcmp.eq.f32.partialorder %v2078, 8.507059e+37
  %v2080 = vand.u32 %v1857, 2147483648
  %v2081 = vor.u32 1.1754944e-38, %v2080
  %v2082 = vsel %vm2079, %v2081, %v2077
  %v2083 = vmul.f32 1.0, %v2082
  %v2084 = vrcp.pop %v1858
  %v2085 = vmul.f32 %v1858, %v2084
  %v2086 = vsub.f32 1.0, %v2085
  %v2087 = vmul.f32 %v2084, %v2086
  %v2088 = vadd.f32 %v2084, %v2087
  %vm2089 = vweird.f32 %v1858
  %vm2090 = vweird.f32 %v2084
  %vm2091 = vmor %vm2089, %vm2090
  %v2092 = vsel %vm2091, %v2084, %v2088
  %v2093 = vand.u32 2147483647, %v1858
  %vm2094 = vcmp.eq.f32.partialorder %v2093, 8.507059e+37
  %v2095 = vand.u32 %v1858, 2147483648
  %v2096 = vor.u32 1.1754944e-38, %v2095
  %v2097 = vsel %vm2094, %v2096, %v2092
  %v2098 = vmul.f32 1.0, %v2097
  %s2099 = scalar_lea.vmem %s7, 128
  %v2100 = vld [vmem:[%s2099] sm:$0xff]
  %v2101 = vld [vmem:[%s2099 + $0x8] sm:$0xff]
  %v2102 = vld [vmem:[%s2099 + $0x10] sm:$0xff]
  %v2103 = vld [vmem:[%s2099 + $0x18] sm:$0xff]
  %v2104 = vld [vmem:[%s2099 + $0x20] sm:$0xff]
  %v2105 = vld [vmem:[%s2099 + $0x28] sm:$0xff]
  %v2106 = vld [vmem:[%s2099 + $0x30] sm:$0xff]
  %v2107 = vld [vmem:[%s2099 + $0x38] sm:$0xff]
  %v2108 = vld [vmem:[%s2099 + $0x40] sm:$0xff]
  %v2109 = vld [vmem:[%s2099 + $0x48] sm:$0xff]
  %v2110 = vld [vmem:[%s2099 + $0x50] sm:$0xff]
  %v2111 = vld [vmem:[%s2099 + $0x58] sm:$0xff]
  %v2112 = vld [vmem:[%s2099 + $0x60] sm:$0xff]
  %v2113 = vld [vmem:[%s2099 + $0x68] sm:$0xff]
  %v2114 = vld [vmem:[%s2099 + $0x70] sm:$0xff]
  %v2115 = vld [vmem:[%s2099 + $0x78] sm:$0xff]
  %s2116 = scalar_lea.vmem %s8, 1
  %v2117 = vld [vmem:[%s2116] sm:$0x1]
  %v2119 = vperm.slane %v2117, 0
  %2121 = vmatpush.msra.mxu0 %v2115
  %2122 = vmatpush.msra.mxu0 %v2114
  %2123 = vmatpush.msra.mxu0 %v2113
  %2124 = vmatpush.msra.mxu0 %v2112
  %2125 = vmatpush.msra.mxu0 %v2111
  %2126 = vmatpush.msra.mxu0 %v2110
  %2127 = vmatpush.msra.mxu0 %v2109
  %2128 = vmatpush.msra.mxu0 %v2108
  %2129 = vmatpush.msra.mxu0 %v2107
  %2130 = vmatpush.msra.mxu0 %v2106
  %2131 = vmatpush.msra.mxu0 %v2105
  %2132 = vmatpush.msra.mxu0 %v2104
  %2133 = vmatpush.msra.mxu0 %v2103
  %2134 = vmatpush.msra.mxu0 %v2102
  %2135 = vmatpush.msra.mxu0 %v2101
  %2136 = vmatpush.msra.mxu0 %v2100
  %2137 = vmatmul.f32.gmra.mxu0 %v1301
  %v2138 = vpop.f32.mrf.mxu0
  %v2139 = vadd.f32 %v2119, %v2138
  %2140 = vmatmul.f32.gmra.mxu0 %v1302
  %v2141 = vpop.f32.mrf.mxu0
  %v2142 = vadd.f32 %v2119, %v2141
  %2143 = vmatmul.f32.gmra.mxu0 %v1303
  %v2144 = vpop.f32.mrf.mxu0
  %v2145 = vadd.f32 %v2119, %v2144
  %2146 = vmatmul.f32.gmra.mxu0 %v1304
  %v2147 = vpop.f32.mrf.mxu0
  %v2148 = vadd.f32 %v2119, %v2147
  %2149 = vmatmul.f32.gmra.mxu0 %v1305
  %v2150 = vpop.f32.mrf.mxu0
  %v2151 = vadd.f32 %v2119, %v2150
  %2152 = vmatmul.f32.gmra.mxu0 %v1306
  %v2153 = vpop.f32.mrf.mxu0
  %v2154 = vadd.f32 %v2119, %v2153
  %2155 = vmatmul.f32.gmra.mxu0 %v1307
  %v2156 = vpop.f32.mrf.mxu0
  %v2157 = vadd.f32 %v2119, %v2156
  %2158 = vmatmul.f32.gmra.mxu0 %v1308
  %v2159 = vpop.f32.mrf.mxu0
  %v2160 = vadd.f32 %v2119, %v2159
  %2161 = vmatmul.f32.gmra.mxu0 %v1309
  %v2162 = vpop.f32.mrf.mxu0
  %v2163 = vadd.f32 %v2119, %v2162
  %2164 = vmatmul.f32.gmra.mxu0 %v1310
  %v2165 = vpop.f32.mrf.mxu0
  %v2166 = vadd.f32 %v2119, %v2165
  %2167 = vmatmul.f32.gmra.mxu0 %v1311
  %v2168 = vpop.f32.mrf.mxu0
  %v2169 = vadd.f32 %v2119, %v2168
  %2170 = vmatmul.f32.gmra.mxu0 %v1312
  %v2171 = vpop.f32.mrf.mxu0
  %v2172 = vadd.f32 %v2119, %v2171
  %2173 = vmatmul.f32.gmra.mxu0 %v1313
  %v2174 = vpop.f32.mrf.mxu0
  %v2175 = vadd.f32 %v2119, %v2174
  %2176 = vmatmul.f32.gmra.mxu0 %v1314
  %v2177 = vpop.f32.mrf.mxu0
  %v2178 = vadd.f32 %v2119, %v2177
  %2179 = vmatmul.f32.gmra.mxu0 %v1315
  %v2180 = vpop.f32.mrf.mxu0
  %v2181 = vadd.f32 %v2119, %v2180
  %2182 = vmatmul.f32.gmra.mxu0 %v1316
  %v2183 = vpop.f32.mrf.mxu0
  %v2184 = vadd.f32 %v2119, %v2183
  %2185 = vdwg.mxu0
  %s2186 = scalar_lea.vmem %s9, 128
  %v2187 = vld [vmem:[%s2186] sm:$0xff]
  %v2188 = vld [vmem:[%s2186 + $0x8] sm:$0xff]
  %v2189 = vld [vmem:[%s2186 + $0x10] sm:$0xff]
  %v2190 = vld [vmem:[%s2186 + $0x18] sm:$0xff]
  %v2191 = vld [vmem:[%s2186 + $0x20] sm:$0xff]
  %v2192 = vld [vmem:[%s2186 + $0x28] sm:$0xff]
  %v2193 = vld [vmem:[%s2186 + $0x30] sm:$0xff]
  %v2194 = vld [vmem:[%s2186 + $0x38] sm:$0xff]
  %v2195 = vld [vmem:[%s2186 + $0x40] sm:$0xff]
  %v2196 = vld [vmem:[%s2186 + $0x48] sm:$0xff]
  %v2197 = vld [vmem:[%s2186 + $0x50] sm:$0xff]
  %v2198 = vld [vmem:[%s2186 + $0x58] sm:$0xff]
  %v2199 = vld [vmem:[%s2186 + $0x60] sm:$0xff]
  %v2200 = vld [vmem:[%s2186 + $0x68] sm:$0xff]
  %v2201 = vld [vmem:[%s2186 + $0x70] sm:$0xff]
  %v2202 = vld [vmem:[%s2186 + $0x78] sm:$0xff]
  %s2203 = scalar_lea.vmem %s10, 1
  %v2204 = vld [vmem:[%s2203] sm:$0x1]
  %v2206 = vperm.slane %v2204, 0
  %2208 = vmatpush.msra.mxu0 %v2202
  %2209 = vmatpush.msra.mxu0 %v2201
  %2210 = vmatpush.msra.mxu0 %v2200
  %2211 = vmatpush.msra.mxu0 %v2199
  %2212 = vmatpush.msra.mxu0 %v2198
  %2213 = vmatpush.msra.mxu0 %v2197
  %2214 = vmatpush.msra.mxu0 %v2196
  %2215 = vmatpush.msra.mxu0 %v2195
  %2216 = vmatpush.msra.mxu0 %v2194
  %2217 = vmatpush.msra.mxu0 %v2193
  %2218 = vmatpush.msra.mxu0 %v2192
  %2219 = vmatpush.msra.mxu0 %v2191
  %2220 = vmatpush.msra.mxu0 %v2190
  %2221 = vmatpush.msra.mxu0 %v2189
  %2222 = vmatpush.msra.mxu0 %v2188
  %2223 = vmatpush.msra.mxu0 %v2187
  %2224 = vmatmul.f32.gmra.mxu0 %v1301
  %v2225 = vpop.f32.mrf.mxu0
  %v2226 = vadd.f32 %v2206, %v2225
  %2227 = vmatmul.f32.gmra.mxu0 %v1302
  %v2228 = vpop.f32.mrf.mxu0
  %v2229 = vadd.f32 %v2206, %v2228
  %2230 = vmatmul.f32.gmra.mxu0 %v1303
  %v2231 = vpop.f32.mrf.mxu0
  %v2232 = vadd.f32 %v2206, %v2231
  %2233 = vmatmul.f32.gmra.mxu0 %v1304
  %v2234 = vpop.f32.mrf.mxu0
  %v2235 = vadd.f32 %v2206, %v2234
  %2236 = vmatmul.f32.gmra.mxu0 %v1305
  %v2237 = vpop.f32.mrf.mxu0
  %v2238 = vadd.f32 %v2206, %v2237
  %2239 = vmatmul.f32.gmra.mxu0 %v1306
  %v2240 = vpop.f32.mrf.mxu0
  %v2241 = vadd.f32 %v2206, %v2240
  %2242 = vmatmul.f32.gmra.mxu0 %v1307
  %v2243 = vpop.f32.mrf.mxu0
  %v2244 = vadd.f32 %v2206, %v2243
  %2245 = vmatmul.f32.gmra.mxu0 %v1308
  %v2246 = vpop.f32.mrf.mxu0
  %v2247 = vadd.f32 %v2206, %v2246
  %2248 = vmatmul.f32.gmra.mxu0 %v1309
  %v2249 = vpop.f32.mrf.mxu0
  %v2250 = vadd.f32 %v2206, %v2249
  %2251 = vmatmul.f32.gmra.mxu0 %v1310
  %v2252 = vpop.f32.mrf.mxu0
  %v2253 = vadd.f32 %v2206, %v2252
  %2254 = vmatmul.f32.gmra.mxu0 %v1311
  %v2255 = vpop.f32.mrf.mxu0
  %v2256 = vadd.f32 %v2206, %v2255
  %2257 = vmatmul.f32.gmra.mxu0 %v1312
  %v2258 = vpop.f32.mrf.mxu0
  %v2259 = vadd.f32 %v2206, %v2258
  %2260 = vmatmul.f32.gmra.mxu0 %v1313
  %v2261 = vpop.f32.mrf.mxu0
  %v2262 = vadd.f32 %v2206, %v2261
  %2263 = vmatmul.f32.gmra.mxu0 %v1314
  %v2264 = vpop.f32.mrf.mxu0
  %v2265 = vadd.f32 %v2206, %v2264
  %2266 = vmatmul.f32.gmra.mxu0 %v1315
  %v2267 = vpop.f32.mrf.mxu0
  %v2268 = vadd.f32 %v2206, %v2267
  %2269 = vmatmul.f32.gmra.mxu0 %v1316
  %v2270 = vpop.f32.mrf.mxu0
  %v2271 = vadd.f32 %v2206, %v2270
  %2272 = vdwg.mxu0
  %v2273 = vmul.f32 %v1482, %v2226
  %v2274 = vmul.f32 %v1497, %v2229
  %v2275 = vmul.f32 %v1512, %v2232
  %v2276 = vmul.f32 %v1527, %v2235
  %v2277 = vmul.f32 %v1542, %v2238
  %v2278 = vmul.f32 %v1557, %v2241
  %v2279 = vmul.f32 %v1572, %v2244
  %v2280 = vmul.f32 %v1587, %v2247
  %v2281 = vmul.f32 %v1602, %v2250
  %v2282 = vmul.f32 %v1617, %v2253
  %v2283 = vmul.f32 %v1632, %v2256
  %v2284 = vmul.f32 %v1647, %v2259
  %v2285 = vmul.f32 %v1662, %v2262
  %v2286 = vmul.f32 %v1677, %v2265
  %v2287 = vmul.f32 %v1692, %v2268
  %v2288 = vmul.f32 %v1707, %v2271
  %v2289 = vadd.f32 %v2139, %v2273
  %v2290 = vadd.f32 %v2142, %v2274
  %v2291 = vadd.f32 %v2145, %v2275
  %v2292 = vadd.f32 %v2148, %v2276
  %v2293 = vadd.f32 %v2151, %v2277
  %v2294 = vadd.f32 %v2154, %v2278
  %v2295 = vadd.f32 %v2157, %v2279
  %v2296 = vadd.f32 %v2160, %v2280
  %v2297 = vadd.f32 %v2163, %v2281
  %v2298 = vadd.f32 %v2166, %v2282
  %v2299 = vadd.f32 %v2169, %v2283
  %v2300 = vadd.f32 %v2172, %v2284
  %v2301 = vadd.f32 %v2175, %v2285
  %v2302 = vadd.f32 %v2178, %v2286
  %v2303 = vadd.f32 %v2181, %v2287
  %v2304 = vadd.f32 %v2184, %v2288
  %v2305 = vtanh.pop %v2289
  %v2306 = vtanh.pop %v2290
  %v2307 = vtanh.pop %v2291
  %v2308 = vtanh.pop %v2292
  %v2309 = vtanh.pop %v2293
  %v2310 = vtanh.pop %v2294
  %v2311 = vtanh.pop %v2295
  %v2312 = vtanh.pop %v2296
  %v2313 = vtanh.pop %v2297
  %v2314 = vtanh.pop %v2298
  %v2315 = vtanh.pop %v2299
  %v2316 = vtanh.pop %v2300
  %v2317 = vtanh.pop %v2301
  %v2318 = vtanh.pop %v2302
  %v2319 = vtanh.pop %v2303
  %v2320 = vtanh.pop %v2304
  %v2321 = vsub.f32 1.0, %v1873
  %v2322 = vsub.f32 1.0, %v1888
  %v2323 = vsub.f32 1.0, %v1903
  %v2324 = vsub.f32 1.0, %v1918
  %v2325 = vsub.f32 1.0, %v1933
  %v2326 = vsub.f32 1.0, %v1948
  %v2327 = vsub.f32 1.0, %v1963
  %v2328 = vsub.f32 1.0, %v1978
  %v2329 = vsub.f32 1.0, %v1993
  %v2330 = vsub.f32 1.0, %v2008
  %v2331 = vsub.f32 1.0, %v2023
  %v2332 = vsub.f32 1.0, %v2038
  %v2333 = vsub.f32 1.0, %v2053
  %v2334 = vsub.f32 1.0, %v2068
  %v2335 = vsub.f32 1.0, %v2083
  %v2336 = vsub.f32 1.0, %v2098
  %v2337 = vmul.f32 %v2321, %v2305
  %v2338 = vmul.f32 %v2322, %v2306
  %v2339 = vmul.f32 %v2323, %v2307
  %v2340 = vmul.f32 %v2324, %v2308
  %v2341 = vmul.f32 %v2325, %v2309
  %v2342 = vmul.f32 %v2326, %v2310
  %v2343 = vmul.f32 %v2327, %v2311
  %v2344 = vmul.f32 %v2328, %v2312
  %v2345 = vmul.f32 %v2329, %v2313
  %v2346 = vmul.f32 %v2330, %v2314
  %v2347 = vmul.f32 %v2331, %v2315
  %v2348 = vmul.f32 %v2332, %v2316
  %v2349 = vmul.f32 %v2333, %v2317
  %v2350 = vmul.f32 %v2334, %v2318
  %v2351 = vmul.f32 %v2335, %v2319
  %v2352 = vmul.f32 %v2336, %v2320
  %v2353 = vmul.f32 %v1873, %v1301
  %v2354 = vmul.f32 %v1888, %v1302
  %v2355 = vmul.f32 %v1903, %v1303
  %v2356 = vmul.f32 %v1918, %v1304
  %v2357 = vmul.f32 %v1933, %v1305
  %v2358 = vmul.f32 %v1948, %v1306
  %v2359 = vmul.f32 %v1963, %v1307
  %v2360 = vmul.f32 %v1978, %v1308
  %v2361 = vmul.f32 %v1993, %v1309
  %v2362 = vmul.f32 %v2008, %v1310
  %v2363 = vmul.f32 %v2023, %v1311
  %v2364 = vmul.f32 %v2038, %v1312
  %v2365 = vmul.f32 %v2053, %v1313
  %v2366 = vmul.f32 %v2068, %v1314
  %v2367 = vmul.f32 %v2083, %v1315
  %v2368 = vmul.f32 %v2098, %v1316
  %v2369 = vadd.f32 %v2337, %v2353
  %v2370 = vadd.f32 %v2338, %v2354
  %v2371 = vadd.f32 %v2339, %v2355
  %v2372 = vadd.f32 %v2340, %v2356
  %v2373 = vadd.f32 %v2341, %v2357
  %v2374 = vadd.f32 %v2342, %v2358
  %v2375 = vadd.f32 %v2343, %v2359
  %v2376 = vadd.f32 %v2344, %v2360
  %v2377 = vadd.f32 %v2345, %v2361
  %v2378 = vadd.f32 %v2346, %v2362
  %v2379 = vadd.f32 %v2347, %v2363
  %v2380 = vadd.f32 %v2348, %v2364
  %v2381 = vadd.f32 %v2349, %v2365
  %v2382 = vadd.f32 %v2350, %v2366
  %v2383 = vadd.f32 %v2351, %v2367
  %v2384 = vadd.f32 %v2352, %v2368
  %2385 = vmatpush.msra.mxu0 %v2384
  %2386 = vmatpush.msra.mxu0 %v2383
  %2387 = vmatpush.msra.mxu0 %v2382
  %2388 = vmatpush.msra.mxu0 %v2381
  %2389 = vmatpush.msra.mxu0 %v2380
  %2390 = vmatpush.msra.mxu0 %v2379
  %2391 = vmatpush.msra.mxu0 %v2378
  %2392 = vmatpush.msra.mxu0 %v2377
  %2393 = vmatpush.msra.mxu0 %v2376
  %2394 = vmatpush.msra.mxu0 %v2375
  %2395 = vmatpush.msra.mxu0 %v2374
  %2396 = vmatpush.msra.mxu0 %v2373
  %2397 = vmatpush.msra.mxu0 %v2372
  %2398 = vmatpush.msra.mxu0 %v2371
  %2399 = vmatpush.msra.mxu0 %v2370
  %2400 = vmatpush.msra.mxu0 %v2369
  %2401 = vmatmul.f32.gmra.mxu0 %v1277
  %v2402 = vpop.f32.mrf.mxu0
  %v2403 = vadd.f32 0.0, %v2402
  %2404 = vmatmul.f32.gmra.mxu0 %v1280
  %v2405 = vpop.f32.mrf.mxu0
  %v2406 = vadd.f32 0.0, %v2405
  %2407 = vmatmul.f32.gmra.mxu0 %v1283
  %v2408 = vpop.f32.mrf.mxu0
  %v2409 = vadd.f32 0.0, %v2408
  %2410 = vmatmul.f32.gmra.mxu0 %v1286
  %v2411 = vpop.f32.mrf.mxu0
  %v2412 = vadd.f32 0.0, %v2411
  %2413 = vmatmul.f32.gmra.mxu0 %v1289
  %v2414 = vpop.f32.mrf.mxu0
  %v2415 = vadd.f32 0.0, %v2414
  %2416 = vmatmul.f32.gmra.mxu0 %v1292
  %v2417 = vpop.f32.mrf.mxu0
  %v2418 = vadd.f32 0.0, %v2417
  %2419 = vmatmul.f32.gmra.mxu0 %v1295
  %v2420 = vpop.f32.mrf.mxu0
  %v2421 = vadd.f32 0.0, %v2420
  %2422 = vmatmul.f32.gmra.mxu0 %v1298
  %v2423 = vpop.f32.mrf.mxu0
  %v2424 = vadd.f32 0.0, %v2423
  %2425 = vdwg.mxu0
  %2426 = vmatpush.msra.mxu0 0.0
  %2427 = vmatpush.msra.mxu0 0.0
  %2428 = vmatpush.msra.mxu0 0.0
  %2429 = vmatpush.msra.mxu0 0.0
  %2430 = vmatpush.msra.mxu0 0.0
  %2431 = vmatpush.msra.mxu0 0.0
  %2432 = vmatpush.msra.mxu0 0.0
  %2433 = vmatpush.msra.mxu0 0.0
  %2434 = vmatpush.msra.mxu0 %v2424
  %2435 = vmatpush.msra.mxu0 %v2421
  %2436 = vmatpush.msra.mxu0 %v2418
  %2437 = vmatpush.msra.mxu0 %v2415
  %2438 = vmatpush.msra.mxu0 %v2412
  %2439 = vmatpush.msra.mxu0 %v2409
  %2440 = vmatpush.msra.mxu0 %v2406
  %2441 = vmatpush.msra.mxu0 %v2403
  %2442 = vmatmul.f32.gmra.mxu0 %v1236
  %v2443 = vpop.f32.mrf.mxu0
  %v2444 = vadd.f32 0.0, %v2443
  %2445 = vmatmul.f32.gmra.mxu0 %v1239
  %v2446 = vpop.f32.mrf.mxu0
  %v2447 = vadd.f32 0.0, %v2446
  %2448 = vmatmul.f32.gmra.mxu0 %v1242
  %v2449 = vpop.f32.mrf.mxu0
  %v2450 = vadd.f32 0.0, %v2449
  %2451 = vmatmul.f32.gmra.mxu0 %v1245
  %v2452 = vpop.f32.mrf.mxu0
  %v2453 = vadd.f32 0.0, %v2452
  %2454 = vmatmul.f32.gmra.mxu0 %v1248
  %v2455 = vpop.f32.mrf.mxu0
  %v2456 = vadd.f32 0.0, %v2455
  %2457 = vmatmul.f32.gmra.mxu0 %v1251
  %v2458 = vpop.f32.mrf.mxu0
  %v2459 = vadd.f32 0.0, %v2458
  %2460 = vmatmul.f32.gmra.mxu0 %v1254
  %v2461 = vpop.f32.mrf.mxu0
  %v2462 = vadd.f32 0.0, %v2461
  %2463 = vmatmul.f32.gmra.mxu0 %v1257
  %v2464 = vpop.f32.mrf.mxu0
  %v2465 = vadd.f32 0.0, %v2464
  %2466 = vdwg.mxu0
  %2467 = vst [vmem:[%s11] sm:$0xff] %v2444
  %2468 = vst [vmem:[%s11 + $0x8] sm:$0xff] %v2447
  %2469 = vst [vmem:[%s11 + $0x10] sm:$0xff] %v2450
  %2470 = vst [vmem:[%s11 + $0x18] sm:$0xff] %v2453
  %2471 = vst [vmem:[%s11 + $0x20] sm:$0xff] %v2456
  %2472 = vst [vmem:[%s11 + $0x28] sm:$0xff] %v2459
  %2473 = vst [vmem:[%s11 + $0x30] sm:$0xff] %v2462
  %2474 = vst [vmem:[%s11 + $0x38] sm:$0xff] %v2465
  // Predicated region
  $region46: #{multilayer_egcno_forward.1} parent=0 // pred_check
    _
  $region47: #{multilayer_egcno_forward.1} parent=0 // pred_check_branch
    %2476 = sbr.rel (0) target = $region49
  $region48: #{multilayer_egcno_forward.1} parent=0 // pred_region
    _
  $region49: #{multilayer_egcno_forward.1} parent=0 // pred_fallthru
    _
  // Predicated region
  $region50: #{multilayer_egcno_forward.1} parent=0 // pred_check
    _
  $region51: #{multilayer_egcno_forward.1} parent=0 // pred_check_branch
    %2478 = sbr.rel (0) target = $region53
  $region52: #{multilayer_egcno_forward.1} parent=0 // pred_region
    _
  $region53: #{multilayer_egcno_forward.1} parent=0 // pred_fallthru
    _

</llo_original>
